<compile_context>
chip_gen: v7x
topology: tpu7x:2x2x1
jax: 0.10.0
libtpu: 0.0.40
codegen_flags: <defaults>
</compile_context>

<pallas_src>
import jax
import jax.numpy as jnp
from jax.experimental import pallas as pl
from jax.experimental.pallas import tpu as pltpu

_NEG_BIG = -1e30  # drives padded-class logits to effectively -inf (no inf arithmetic)


def _round_up(x, m):
    return ((x + m - 1) // m) * m


# --------------------------------------------------------------------------- #
# Kernel: 4 matmuls + ReLUs + log_softmax, fully resident in VMEM per batch tile
# --------------------------------------------------------------------------- #
def mlp_kernel(x_ref, w1_ref, b1_ref, w2_ref, b2_ref,
               w3_ref, b3_ref, w4_ref, b4_ref, o_ref):
    # x arrives as bf16 (cast in the wrapper); MXU accumulates in f32, bias add in
    # f32, then activations drop back to bf16 for the next MXU pass.  The ReLU runs
    # in bf16 (identical result to f32-relu-then-cast, half the VALU volume).
    x = x_ref[...]

    h = jnp.dot(x, w1_ref[...], preferred_element_type=jnp.float32) + b1_ref[...]
    h = jnp.maximum(h.astype(jnp.bfloat16), jnp.bfloat16(0.0))

    h = jnp.dot(h, w2_ref[...], preferred_element_type=jnp.float32) + b2_ref[...]
    h = jnp.maximum(h.astype(jnp.bfloat16), jnp.bfloat16(0.0))

    h = jnp.dot(h, w3_ref[...], preferred_element_type=jnp.float32) + b3_ref[...]
    h = jnp.maximum(h.astype(jnp.bfloat16), jnp.bfloat16(0.0))

    logits = jnp.dot(h, w4_ref[...], preferred_element_type=jnp.float32) + b4_ref[...]

    # log_softmax over classes (last dim == PyTorch dim=1), all in f32.
    m = jnp.max(logits, axis=-1, keepdims=True)
    shifted = logits - m
    lse = jnp.log(jnp.sum(jnp.exp(shifted), axis=-1, keepdims=True))
    o_ref[...] = (shifted - lse).astype(o_ref.dtype)


# --------------------------------------------------------------------------- #
# One-time parameter preparation (hoisted out of the forward path)
# --------------------------------------------------------------------------- #
def prepare_params(params):
    """Zero-pad hidden/class dims to multiples of 128, cast weights to bf16.

    Call once (e.g. after init / after each optimizer step) and reuse the result
    across forward calls -- padding + casting is NOT redone per call.
    Biases stay f32 (the -1e30 padded-class trick relies on the f32 epilogue).
    """
    def pad_w(w, rows, cols):
        full = jnp.zeros((rows, cols), jnp.float32)
        full = full.at[: w.shape[0], : w.shape[1]].set(w)
        return full.astype(jnp.bfloat16)

    def pad_b(b, cols, fill=0.0):
        full = jnp.full((1, cols), fill, jnp.float32)
        return full.at[:, : b.shape[1]].set(b)

    f = params["w1"].shape[0]
    h1 = _round_up(params["w1"].shape[1], 128)   # 300 -> 384
    h2 = _round_up(params["w2"].shape[1], 128)   # 300 -> 384
    h3 = _round_up(params["w3"].shape[1], 128)   # 400 -> 512
    cp = _round_up(params["w4"].shape[1], 128)   # n_classes -> 128

    padded = (
        pad_w(params["w1"], f, h1),  pad_b(params["b1"], h1),
        pad_w(params["w2"], h1, h2), pad_b(params["b2"], h2),
        pad_w(params["w3"], h2, h3), pad_b(params["b3"], h3),
        pad_w(params["w4"], h3, cp), pad_b(params["b4"], cp, fill=_NEG_BIG),
    )
    padded = jax.block_until_ready(padded)   # materialize now, not per-forward
    return {
        "padded": padded,
        "n_features": f,
        "n_classes": params["w4"].shape[1],
        "c_pad": cp,
    }


# --------------------------------------------------------------------------- #
# Forward wrapper
# --------------------------------------------------------------------------- #
def mlp_forward(x, prepared, *, batch_tile=1024):
    """x: (B, n_features) f32 or bf16.  prepared: output of prepare_params()."""
    B, F = x.shape
    assert F == prepared["n_features"]
    padded = prepared["padded"]
    c_pad = prepared["c_pad"]
    n_classes = prepared["n_classes"]

    # Batch tile: multiple of 8 sublanes, capped at the padded batch.
    batch_tile = max(8, (min(batch_tile, _round_up(B, 8)) // 8) * 8)
    # Guarantee >= 2 grid steps when B > 8 so the "parallel" axis shards across
    # both TensorCores on v7x and DMA/compute overlap kicks in on every chip.
    if B > 8:
        batch_tile = min(batch_tile, _round_up(pl.cdiv(B, 2), 8))
    n_tiles = pl.cdiv(B, batch_tile)
    b_pad = n_tiles * batch_tile

    # bf16 into the MXU either way -> cast once here (halves the x DMA per tile).
    x = x.astype(jnp.bfloat16)
    if b_pad != B:
        x = jnp.pad(x, ((0, b_pad - B), (0, 0)))

    row_map = lambda i: (i, 0)
    rep_map = lambda i: (0, 0)

    # Weights/biases are small (<1 MB total) and grid-invariant; default
    # double-buffering costs negligible VMEM at these tile sizes, so they keep the
    # default pipeline mode.
    weight_specs = [pl.BlockSpec(w.shape, rep_map) for w in padded]

    out = pl.pallas_call(
        mlp_kernel,
        out_shape=jax.ShapeDtypeStruct((b_pad, c_pad), jnp.float32),
        grid_spec=pl.GridSpec(
            grid=(n_tiles,),
            in_specs=[pl.BlockSpec((batch_tile, F), row_map)] + weight_specs,
            out_specs=pl.BlockSpec((batch_tile, c_pad), row_map),
        ),
        compiler_params=pltpu.CompilerParams(
            dimension_semantics=("parallel",),      # megacore sharding on v7x
            vmem_limit_bytes=40 * 1024 * 1024,      # > default scoped limits, < v7x 64 MiB
        ),
    )(x, *padded)

    return out[:B, :n_classes]


# --------------------------------------------------------------------------- #
# Init + reference
# --------------------------------------------------------------------------- #
def init_params(key, n_features, n_classes):
    """PyTorch-style Linear init; weights stored transposed (in, out) for y = x @ W."""
    dims = [(n_features, 300), (300, 300), (300, 400), (400, n_classes)]
    params = {}
    for idx, (fan_in, fan_out) in enumerate(dims, start=1):
        key, kw, kb = jax.random.split(key, 3)
        bound = 1.0 / jnp.sqrt(fan_in)
        params[f"w{idx}"] = jax.random.uniform(
            kw, (fan_in, fan_out), jnp.float32, -bound, bound)
        params[f"b{idx}"] = jax.random.uniform(
            kb, (1, fan_out), jnp.float32, -bound, bound)
    return params


def mlp_reference(x, params, *, bf16=True):
    def lin(h, w, b):
        if bf16:
            h = h.astype(jnp.bfloat16)
            w = w.astype(jnp.bfloat16)
        return jnp.dot(h, w, preferred_element_type=jnp.float32) + b

    h = jnp.maximum(lin(x, params["w1"], params["b1"]), 0.0)
    h = jnp.maximum(lin(h, params["w2"], params["b2"]), 0.0)
    h = jnp.maximum(lin(h, params["w3"], params["b3"]), 0.0)
    logits = lin(h, params["w4"], params["b4"])
    return jax.nn.log_softmax(logits, axis=1)


if __name__ == "__main__":
    key = jax.random.PRNGKey(0)
    n_features, n_classes = 32, 10
    batch = 20            # deliberately NOT a multiple of the batch tile

    kx, kp = jax.random.split(key)
    x = jax.random.normal(kx, (batch, n_features), jnp.float32)
    params = init_params(kp, n_features, n_classes)

    # One-time padding / casting of weights (hoisted out of the forward path).
    prepared = prepare_params(params)

    # batch_tile=8 -> 3 grid steps: exercises pipelining, megacore sharding and the
    # padded final tile at small test shapes.
    out = mlp_forward(x, prepared, batch_tile=8)
    out = jax.block_until_ready(out)
    assert out.shape == (batch, n_classes)

    # Also run through the default (large-tile) path.
    out_default = jax.block_until_ready(mlp_forward(x, prepared))
    assert jnp.allclose(out, out_default, atol=1e-5, rtol=1e-5)

    # Matches a reference with identical bf16-in / f32-accumulate numerics ...
    ref_bf16 = mlp_reference(x, params, bf16=True)
    assert jnp.allclose(out, ref_bf16, atol=2e-3, rtol=2e-3), "mismatch vs bf16 reference"
    # ... and stays close to the full-f32 reference.
    ref_f32 = mlp_reference(x, params, bf16=False)
    assert jnp.allclose(out, ref_f32, atol=5e-2, rtol=5e-2), "mismatch vs f32 reference"
    # log-probabilities must exponentiate to a valid distribution
    assert jnp.allclose(jnp.sum(jnp.exp(out), axis=1), 1.0, atol=1e-3)

    print("KERNEL_OK")
</pallas_src>

<mosaic_0001>
module attributes {stable_mosaic.version = 11 : i64} {
  func.func @mlp_kernel(%arg0: i32, %arg1: memref<8x32xbf16, #tpu.memory_space<vmem>>, %arg2: memref<32x384xbf16, #tpu.memory_space<vmem>>, %arg3: memref<1x384xf32, #tpu.memory_space<vmem>>, %arg4: memref<384x384xbf16, #tpu.memory_space<vmem>>, %arg5: memref<1x384xf32, #tpu.memory_space<vmem>>, %arg6: memref<384x512xbf16, #tpu.memory_space<vmem>>, %arg7: memref<1x512xf32, #tpu.memory_space<vmem>>, %arg8: memref<512x128xbf16, #tpu.memory_space<vmem>>, %arg9: memref<1x128xf32, #tpu.memory_space<vmem>>, %arg10: memref<8x128xf32, #tpu.memory_space<vmem>>) attributes {dimension_semantics = [#tpu.dimension_semantics<parallel>], iteration_bounds = array<i64: 3>, scalar_prefetch = 0 : i64, scratch_operands = 0 : i64, tpu.core_type = #tpu.core_type<tc>, window_params = [{transform_indices = @transform_0, window_bounds = array<i64: 8, 32>}, {pipeline_mode = #tpu.pipeline_mode<synchronous>, transform_indices = @transform_1, window_bounds = array<i64: 32, 384>}, {pipeline_mode = #tpu.pipeline_mode<synchronous>, transform_indices = @transform_2, window_bounds = array<i64: 1, 384>}, {pipeline_mode = #tpu.pipeline_mode<synchronous>, transform_indices = @transform_3, window_bounds = array<i64: 384, 384>}, {pipeline_mode = #tpu.pipeline_mode<synchronous>, transform_indices = @transform_4, window_bounds = array<i64: 1, 384>}, {pipeline_mode = #tpu.pipeline_mode<synchronous>, transform_indices = @transform_5, window_bounds = array<i64: 384, 512>}, {pipeline_mode = #tpu.pipeline_mode<synchronous>, transform_indices = @transform_6, window_bounds = array<i64: 1, 512>}, {pipeline_mode = #tpu.pipeline_mode<synchronous>, transform_indices = @transform_7, window_bounds = array<i64: 512, 128>}, {pipeline_mode = #tpu.pipeline_mode<synchronous>, transform_indices = @transform_8, window_bounds = array<i64: 1, 128>}, {transform_indices = @transform_9, window_bounds = array<i64: 8, 128>}]} {
    %c0 = arith.constant 0 : index
    %c0_0 = arith.constant 0 : index
    %0 = vector.load %arg1[%c0, %c0_0] : memref<8x32xbf16, #tpu.memory_space<vmem>>, vector<8x32xbf16>
    %c0_1 = arith.constant 0 : index
    %c0_2 = arith.constant 0 : index
    %1 = vector.load %arg2[%c0_1, %c0_2] : memref<32x384xbf16, #tpu.memory_space<vmem>>, vector<32x384xbf16>
    %cst = arith.constant dense<0.000000e+00> : vector<8x384xf32>
    %2 = tpu.matmul %0, %1, %cst {dimension_numbers = #tpu.dot_dimension_numbers<[1], [0], [0], [1], [0, 0, 1, 1], [], []>} : vector<8x32xbf16>, vector<32x384xbf16>, vector<8x384xf32> -> vector<8x384xf32>
    %c0_3 = arith.constant 0 : index
    %c0_4 = arith.constant 0 : index
    %3 = vector.load %arg3[%c0_3, %c0_4] : memref<1x384xf32, #tpu.memory_space<vmem>>, vector<1x384xf32>
    %4 = vector.broadcast %3 : vector<1x384xf32> to vector<8x384xf32>
    %5 = arith.addf %2, %4 : vector<8x384xf32>
    %6 = arith.truncf %5 : vector<8x384xf32> to vector<8x384xbf16>
    %cst_5 = arith.constant 0.000000e+00 : bf16
    %7 = vector.broadcast %cst_5 : bf16 to vector<8x384xbf16>
    %8 = arith.maximumf %6, %7 : vector<8x384xbf16>
    %c0_6 = arith.constant 0 : index
    %c0_7 = arith.constant 0 : index
    %9 = vector.load %arg4[%c0_6, %c0_7] : memref<384x384xbf16, #tpu.memory_space<vmem>>, vector<384x384xbf16>
    %cst_8 = arith.constant dense<0.000000e+00> : vector<8x384xf32>
    %10 = tpu.matmul %8, %9, %cst_8 {dimension_numbers = #tpu.dot_dimension_numbers<[1], [0], [0], [1], [0, 0, 1, 1], [], []>} : vector<8x384xbf16>, vector<384x384xbf16>, vector<8x384xf32> -> vector<8x384xf32>
    %c0_9 = arith.constant 0 : index
    %c0_10 = arith.constant 0 : index
    %11 = vector.load %arg5[%c0_9, %c0_10] : memref<1x384xf32, #tpu.memory_space<vmem>>, vector<1x384xf32>
    %12 = vector.broadcast %11 : vector<1x384xf32> to vector<8x384xf32>
    %13 = arith.addf %10, %12 : vector<8x384xf32>
    %14 = arith.truncf %13 : vector<8x384xf32> to vector<8x384xbf16>
    %cst_11 = arith.constant 0.000000e+00 : bf16
    %15 = vector.broadcast %cst_11 : bf16 to vector<8x384xbf16>
    %16 = arith.maximumf %14, %15 : vector<8x384xbf16>
    %c0_12 = arith.constant 0 : index
    %c0_13 = arith.constant 0 : index
    %17 = vector.load %arg6[%c0_12, %c0_13] : memref<384x512xbf16, #tpu.memory_space<vmem>>, vector<384x512xbf16>
    %cst_14 = arith.constant dense<0.000000e+00> : vector<8x512xf32>
    %18 = tpu.matmul %16, %17, %cst_14 {dimension_numbers = #tpu.dot_dimension_numbers<[1], [0], [0], [1], [0, 0, 1, 1], [], []>} : vector<8x384xbf16>, vector<384x512xbf16>, vector<8x512xf32> -> vector<8x512xf32>
    %c0_15 = arith.constant 0 : index
    %c0_16 = arith.constant 0 : index
    %19 = vector.load %arg7[%c0_15, %c0_16] : memref<1x512xf32, #tpu.memory_space<vmem>>, vector<1x512xf32>
    %20 = vector.broadcast %19 : vector<1x512xf32> to vector<8x512xf32>
    %21 = arith.addf %18, %20 : vector<8x512xf32>
    %22 = arith.truncf %21 : vector<8x512xf32> to vector<8x512xbf16>
    %cst_17 = arith.constant 0.000000e+00 : bf16
    %23 = vector.broadcast %cst_17 : bf16 to vector<8x512xbf16>
    %24 = arith.maximumf %22, %23 : vector<8x512xbf16>
    %c0_18 = arith.constant 0 : index
    %c0_19 = arith.constant 0 : index
    %25 = vector.load %arg8[%c0_18, %c0_19] : memref<512x128xbf16, #tpu.memory_space<vmem>>, vector<512x128xbf16>
    %cst_20 = arith.constant dense<0.000000e+00> : vector<8x128xf32>
    %26 = tpu.matmul %24, %25, %cst_20 {dimension_numbers = #tpu.dot_dimension_numbers<[1], [0], [0], [1], [0, 0, 1, 1], [], []>} : vector<8x512xbf16>, vector<512x128xbf16>, vector<8x128xf32> -> vector<8x128xf32>
    %c0_21 = arith.constant 0 : index
    %c0_22 = arith.constant 0 : index
    %27 = vector.load %arg9[%c0_21, %c0_22] : memref<1x128xf32, #tpu.memory_space<vmem>>, vector<1x128xf32>
    %28 = vector.broadcast %27 : vector<1x128xf32> to vector<8x128xf32>
    %29 = arith.addf %26, %28 : vector<8x128xf32>
    %cst_23 = arith.constant dense<0xFF800000> : vector<8xf32>
    %30 = vector.multi_reduction <maximumf>, %29, %cst_23 [1] : vector<8x128xf32> to vector<8xf32>
    %31 = vector.shape_cast %30 : vector<8xf32> to vector<8x1xf32>
    %32 = vector.broadcast %31 : vector<8x1xf32> to vector<8x128xf32>
    %33 = arith.subf %29, %32 : vector<8x128xf32>
    %34 = math.exp %33 : vector<8x128xf32>
    %cst_24 = arith.constant dense<0.000000e+00> : vector<8xf32>
    %35 = vector.multi_reduction <add>, %34, %cst_24 [1] : vector<8x128xf32> to vector<8xf32>
    %36 = vector.shape_cast %35 : vector<8xf32> to vector<8x1xf32>
    %37 = math.log %36 : vector<8x1xf32>
    %38 = vector.broadcast %37 : vector<8x1xf32> to vector<8x128xf32>
    %39 = arith.subf %33, %38 : vector<8x128xf32>
    %c0_25 = arith.constant 0 : index
    %c0_26 = arith.constant 0 : index
    %40 = vector.load %arg10[%c0_25, %c0_26] : memref<8x128xf32, #tpu.memory_space<vmem>>, vector<8x128xf32>
    tpu.vector_store %arg10[%c0_25, %c0_26], %39 {strides = array<i32>} : memref<8x128xf32, #tpu.memory_space<vmem>>, vector<8x128xf32>,
    return
  }
  func.func @transform_0(%arg0: i32) -> (i32, i32) {
    %c0_i32 = arith.constant 0 : i32
    %c0_i32_0 = arith.constant 0 : i32
    return %arg0, %c0_i32 : i32, i32
  }
  func.func @transform_1(%arg0: i32) -> (i32, i32) {
    %c0_i32 = arith.constant 0 : i32
    %c0_i32_0 = arith.constant 0 : i32
    %c0_i32_1 = arith.constant 0 : i32
    return %c0_i32, %c0_i32_0 : i32, i32
  }
  func.func @transform_2(%arg0: i32) -> (i32, i32) {
    %c0_i32 = arith.constant 0 : i32
    %c0_i32_0 = arith.constant 0 : i32
    %c0_i32_1 = arith.constant 0 : i32
    return %c0_i32, %c0_i32_0 : i32, i32
  }
  func.func @transform_3(%arg0: i32) -> (i32, i32) {
    %c0_i32 = arith.constant 0 : i32
    %c0_i32_0 = arith.constant 0 : i32
    %c0_i32_1 = arith.constant 0 : i32
    return %c0_i32, %c0_i32_0 : i32, i32
  }
  func.func @transform_4(%arg0: i32) -> (i32, i32) {
    %c0_i32 = arith.constant 0 : i32
    %c0_i32_0 = arith.constant 0 : i32
    %c0_i32_1 = arith.constant 0 : i32
    return %c0_i32, %c0_i32_0 : i32, i32
  }
  func.func @transform_5(%arg0: i32) -> (i32, i32) {
    %c0_i32 = arith.constant 0 : i32
    %c0_i32_0 = arith.constant 0 : i32
    %c0_i32_1 = arith.constant 0 : i32
    return %c0_i32, %c0_i32_0 : i32, i32
  }
  func.func @transform_6(%arg0: i32) -> (i32, i32) {
    %c0_i32 = arith.constant 0 : i32
    %c0_i32_0 = arith.constant 0 : i32
    %c0_i32_1 = arith.constant 0 : i32
    return %c0_i32, %c0_i32_0 : i32, i32
  }
  func.func @transform_7(%arg0: i32) -> (i32, i32) {
    %c0_i32 = arith.constant 0 : i32
    %c0_i32_0 = arith.constant 0 : i32
    %c0_i32_1 = arith.constant 0 : i32
    return %c0_i32, %c0_i32_0 : i32, i32
  }
  func.func @transform_8(%arg0: i32) -> (i32, i32) {
    %c0_i32 = arith.constant 0 : i32
    %c0_i32_0 = arith.constant 0 : i32
    %c0_i32_1 = arith.constant 0 : i32
    return %c0_i32, %c0_i32_0 : i32, i32
  }
  func.func @transform_9(%arg0: i32) -> (i32, i32) {
    %c0_i32 = arith.constant 0 : i32
    %c0_i32_0 = arith.constant 0 : i32
    return %arg0, %c0_i32 : i32, i32
  }
}

</mosaic_0001>

<llo_original>
// kernel: tpu_custom_call.1
$region0: #{tpu_custom_call.1}
  #allocation0 [shape = 'u32[]', space=smem, size = 0x4, offset = 0x4, fixed_abs, tag = 'smem constant byte address 0x4 - core index']
  #allocation1 [shape = 'u32[144,128]{1,0:T(1,128)}', space=vmem, size = 0x12000, scoped, tag = 'internal scratch']
  %s0 = inlined_call_operand.hbm [shape: bf16[24,32], index: 0, kind: input, shape index: {}]
  %s1 = inlined_call_operand.hbm [shape: bf16[32,384], index: 1, kind: input, shape index: {}]
  %s2 = inlined_call_operand.vmem [shape: f32[1,384], index: 2, kind: input, shape index: {}]
  %s3 = inlined_call_operand.hbm [shape: bf16[384,384], index: 3, kind: input, shape index: {}]
  %s4 = inlined_call_operand.vmem [shape: f32[1,384], index: 4, kind: input, shape index: {}]
  %s5 = inlined_call_operand.hbm [shape: bf16[384,512], index: 5, kind: input, shape index: {}]
  %s6 = inlined_call_operand.vmem [shape: f32[1,512], index: 6, kind: input, shape index: {}]
  %s7 = inlined_call_operand.hbm [shape: bf16[512,128], index: 7, kind: input, shape index: {}]
  %s8 = inlined_call_operand.vmem [shape: f32[1,128], index: 8, kind: input, shape index: {}]
  %s9 = inlined_call_operand.hbm [shape: f32[24,128], index: 9, kind: output, shape index: {}]
  %s10 = sld [smem:[#allocation0]]
  $region89: #{tpu_custom_call.1} parent=0
    _
  %s12 = ssub.s32 1, %s10
  %s13 = scalar_select 0, %s12, %s10
  $region1: #{tpu_custom_call.1} parent=0
    #allocation2 [shape = 'u8[4096]{0}', space=vmem, size = 0x1000, scoped, tag = 'input window, operand 0']
    #allocation3 [shape = 's32[2]{0}', space=sflag, size = 0x8, scoped, tag = 'scoped memory for tpu_custom_call.1']
    #allocation4 [shape = 's32[2]{0}', space=sflag, size = 0x8, scoped, tag = 'scoped memory for tpu_custom_call.1']
    #allocation5 [shape = 'u8[24576]{0}', space=vmem, size = 0x6000, scoped, tag = 'input window, operand 1, single buffered']
    #allocation6 [shape = 's32[1]{0}', space=sflag, size = 0x4, scoped, tag = 'scoped memory for tpu_custom_call.1']
    #allocation7 [shape = 'u8[294912]{0}', space=vmem, size = 0x48000, scoped, tag = 'input window, operand 3, single buffered']
    #allocation8 [shape = 'u8[393216]{0}', space=vmem, size = 0x60000, scoped, tag = 'input window, operand 5, single buffered']
    #allocation9 [shape = 's32[1]{0}', space=sflag, size = 0x4, scoped, tag = 'scoped memory for tpu_custom_call.1']
    #allocation10 [shape = 'u8[131072]{0}', space=vmem, size = 0x20000, scoped, tag = 'input window, operand 7, single buffered']
    #allocation11 [shape = 'u8[8192]{0}', space=vmem, size = 0x2000, scoped, tag = 'output window, operand 0']
    %14 = vsyncpa [#allocation3], 0
    %s15 = scalar_lea.sflag [#allocation3], 1
    %16 = vsyncpa %s15, 0
    %17 = vsyncpa [#allocation6], 0
    %18 = vsyncpa [#allocation9], 0
    %19 = vsyncpa [#allocation4], 0
    %s20 = scalar_lea.sflag [#allocation4], 1
    %21 = vsyncpa %s20, 0
    loop: start=0, step=1, limit=5
    $region2: #{tpu_custom_call.1} parent=1 // loop_pre_header
      _
    $region3: #{tpu_custom_call.1} parent=1 // loop_header
      %s23 = sphi 0, %s27
      %p24 = scmp.ge.s32.totalorder %s23, 5
      %s33 = sphi 0, %s35
      %s36 = sphi 0, %s33
      %s37 = sphi 0, %s36
      %s53 = sphi 0, %s37
      %s57 = sphi 0, %s57
      %s59 = sphi 0, %s57
      %s60 = sphi 0, %s59
      %s74 = sphi 0, %s60
      %s78 = sphi 0, %s78
      %s80 = sphi 0, %s78
      %s81 = sphi 0, %s80
      %s95 = sphi 0, %s81
      %s99 = sphi 0, %s99
      %s101 = sphi 0, %s99
      %s102 = sphi 0, %s101
      %s116 = sphi 0, %s102
      %s120 = sphi 0, %s120
      %s122 = sphi 0, %s120
      %s123 = sphi 0, %s122
      %s137 = sphi 0, %s123
      %s141 = sphi 0, %s141
      %s143 = sphi 0, %s141
      %s144 = sphi 0, %s143
      %s158 = sphi 0, %s144
      %s162 = sphi 0, %s162
      %s164 = sphi 0, %s162
      %s165 = sphi 0, %s164
      %s179 = sphi 0, %s165
      %s183 = sphi 0, %s183
      %s185 = sphi 0, %s183
      %s186 = sphi 0, %s185
      %s200 = sphi 0, %s186
      %s204 = sphi 0, %s204
      %s206 = sphi 0, %s204
      %s207 = sphi 0, %s206
      %s221 = sphi 0, %s207
      %s227 = sphi 0, %s229
      %s230 = sphi 0, %s227
      %s231 = sphi 0, %s230
      %s247 = sphi 0, %s231
    $region4: #{tpu_custom_call.1} parent=1 // loop_header_branch
      %26 = sbr.rel (%p24) target = $region8
    $region5: #{tpu_custom_call.1} parent=1 // loop_body
      %s28 = ssub.s32 %s23, 1
      %s29 = ssub.s32 %s23, 2
      %s30 = sadd.s32 %s23, 1
      %s31 = ssub.s32 %s23, %s30
      %p32 = scmp.eq.s32.totalorder %s31, 0
      %s34 = sadd.s32 %s33, 1
      %s35 = scalar_select %p32, %s33, %s34
      %p38 = pneg %p32
      %p39 = scmp.eq.s32.totalorder %s23, 2
      %p40 = por %p38, %p39
      %p41 = scmp.ne.s32.totalorder %s33, %s36
      %p42 = scmp.eq.s32.totalorder %s23, 0
      %p43 = por %p41, %p42
      %p44 = scmp.ne.s32.totalorder %s33, %s36
      %p45 = scmp.eq.s32.totalorder %s28, 2
      %p46 = por %p44, %p45
      %p47 = scmp.ne.s32.totalorder %s36, %s37
      %p48 = scmp.eq.s32.totalorder %s28, 0
      %p49 = por %p47, %p48
      %p50 = scmp.ne.s32.totalorder %s36, %s37
      %p51 = scmp.eq.s32.totalorder %s29, 2
      %p52 = por %p50, %p51
      %p54 = scmp.ne.s32.totalorder %s37, %s53
      %p55 = scmp.eq.s32.totalorder %s29, 0
      %p56 = por %p54, %p55
      %s58 = sadd.s32 %s57, 1
      %p61 = scmp.eq.s32.totalorder %s23, 2
      %p62 = scmp.ne.s32.totalorder %s57, %s59
      %p63 = scmp.eq.s32.totalorder %s23, 0
      %p64 = por %p62, %p63
      %p65 = scmp.ne.s32.totalorder %s57, %s59
      %p66 = scmp.eq.s32.totalorder %s28, 2
      %p67 = por %p65, %p66
      %p68 = scmp.ne.s32.totalorder %s59, %s60
      %p69 = scmp.eq.s32.totalorder %s28, 0
      %p70 = por %p68, %p69
      %p71 = scmp.ne.s32.totalorder %s59, %s60
      %p72 = scmp.eq.s32.totalorder %s29, 2
      %p73 = por %p71, %p72
      %p75 = scmp.ne.s32.totalorder %s60, %s74
      %p76 = scmp.eq.s32.totalorder %s29, 0
      %p77 = por %p75, %p76
      %s79 = sadd.s32 %s78, 1
      %p82 = scmp.eq.s32.totalorder %s23, 2
      %p83 = scmp.ne.s32.totalorder %s78, %s80
      %p84 = scmp.eq.s32.totalorder %s23, 0
      %p85 = por %p83, %p84
      %p86 = scmp.ne.s32.totalorder %s78, %s80
      %p87 = scmp.eq.s32.totalorder %s28, 2
      %p88 = por %p86, %p87
      %p89 = scmp.ne.s32.totalorder %s80, %s81
      %p90 = scmp.eq.s32.totalorder %s28, 0
      %p91 = por %p89, %p90
      %p92 = scmp.ne.s32.totalorder %s80, %s81
      %p93 = scmp.eq.s32.totalorder %s29, 2
      %p94 = por %p92, %p93
      %p96 = scmp.ne.s32.totalorder %s81, %s95
      %p97 = scmp.eq.s32.totalorder %s29, 0
      %p98 = por %p96, %p97
      %s100 = sadd.s32 %s99, 1
      %p103 = scmp.eq.s32.totalorder %s23, 2
      %p104 = scmp.ne.s32.totalorder %s99, %s101
      %p105 = scmp.eq.s32.totalorder %s23, 0
      %p106 = por %p104, %p105
      %p107 = scmp.ne.s32.totalorder %s99, %s101
      %p108 = scmp.eq.s32.totalorder %s28, 2
      %p109 = por %p107, %p108
      %p110 = scmp.ne.s32.totalorder %s101, %s102
      %p111 = scmp.eq.s32.totalorder %s28, 0
      %p112 = por %p110, %p111
      %p113 = scmp.ne.s32.totalorder %s101, %s102
      %p114 = scmp.eq.s32.totalorder %s29, 2
      %p115 = por %p113, %p114
      %p117 = scmp.ne.s32.totalorder %s102, %s116
      %p118 = scmp.eq.s32.totalorder %s29, 0
      %p119 = por %p117, %p118
      %s121 = sadd.s32 %s120, 1
      %p124 = scmp.eq.s32.totalorder %s23, 2
      %p125 = scmp.ne.s32.totalorder %s120, %s122
      %p126 = scmp.eq.s32.totalorder %s23, 0
      %p127 = por %p125, %p126
      %p128 = scmp.ne.s32.totalorder %s120, %s122
      %p129 = scmp.eq.s32.totalorder %s28, 2
      %p130 = por %p128, %p129
      %p131 = scmp.ne.s32.totalorder %s122, %s123
      %p132 = scmp.eq.s32.totalorder %s28, 0
      %p133 = por %p131, %p132
      %p134 = scmp.ne.s32.totalorder %s122, %s123
      %p135 = scmp.eq.s32.totalorder %s29, 2
      %p136 = por %p134, %p135
      %p138 = scmp.ne.s32.totalorder %s123, %s137
      %p139 = scmp.eq.s32.totalorder %s29, 0
      %p140 = por %p138, %p139
      %s142 = sadd.s32 %s141, 1
      %p145 = scmp.eq.s32.totalorder %s23, 2
      %p146 = scmp.ne.s32.totalorder %s141, %s143
      %p147 = scmp.eq.s32.totalorder %s23, 0
      %p148 = por %p146, %p147
      %p149 = scmp.ne.s32.totalorder %s141, %s143
      %p150 = scmp.eq.s32.totalorder %s28, 2
      %p151 = por %p149, %p150
      %p152 = scmp.ne.s32.totalorder %s143, %s144
      %p153 = scmp.eq.s32.totalorder %s28, 0
      %p154 = por %p152, %p153
      %p155 = scmp.ne.s32.totalorder %s143, %s144
      %p156 = scmp.eq.s32.totalorder %s29, 2
      %p157 = por %p155, %p156
      %p159 = scmp.ne.s32.totalorder %s144, %s158
      %p160 = scmp.eq.s32.totalorder %s29, 0
      %p161 = por %p159, %p160
      %s163 = sadd.s32 %s162, 1
      %p166 = scmp.eq.s32.totalorder %s23, 2
      %p167 = scmp.ne.s32.totalorder %s162, %s164
      %p168 = scmp.eq.s32.totalorder %s23, 0
      %p169 = por %p167, %p168
      %p170 = scmp.ne.s32.totalorder %s162, %s164
      %p171 = scmp.eq.s32.totalorder %s28, 2
      %p172 = por %p170, %p171
      %p173 = scmp.ne.s32.totalorder %s164, %s165
      %p174 = scmp.eq.s32.totalorder %s28, 0
      %p175 = por %p173, %p174
      %p176 = scmp.ne.s32.totalorder %s164, %s165
      %p177 = scmp.eq.s32.totalorder %s29, 2
      %p178 = por %p176, %p177
      %p180 = scmp.ne.s32.totalorder %s165, %s179
      %p181 = scmp.eq.s32.totalorder %s29, 0
      %p182 = por %p180, %p181
      %s184 = sadd.s32 %s183, 1
      %p187 = scmp.eq.s32.totalorder %s23, 2
      %p188 = scmp.ne.s32.totalorder %s183, %s185
      %p189 = scmp.eq.s32.totalorder %s23, 0
      %p190 = por %p188, %p189
      %p191 = scmp.ne.s32.totalorder %s183, %s185
      %p192 = scmp.eq.s32.totalorder %s28, 2
      %p193 = por %p191, %p192
      %p194 = scmp.ne.s32.totalorder %s185, %s186
      %p195 = scmp.eq.s32.totalorder %s28, 0
      %p196 = por %p194, %p195
      %p197 = scmp.ne.s32.totalorder %s185, %s186
      %p198 = scmp.eq.s32.totalorder %s29, 2
      %p199 = por %p197, %p198
      %p201 = scmp.ne.s32.totalorder %s186, %s200
      %p202 = scmp.eq.s32.totalorder %s29, 0
      %p203 = por %p201, %p202
      %s205 = sadd.s32 %s204, 1
      %p208 = scmp.eq.s32.totalorder %s23, 2
      %p209 = scmp.ne.s32.totalorder %s204, %s206
      %p210 = scmp.eq.s32.totalorder %s23, 0
      %p211 = por %p209, %p210
      %p212 = scmp.ne.s32.totalorder %s204, %s206
      %p213 = scmp.eq.s32.totalorder %s28, 2
      %p214 = por %p212, %p213
      %p215 = scmp.ne.s32.totalorder %s206, %s207
      %p216 = scmp.eq.s32.totalorder %s28, 0
      %p217 = por %p215, %p216
      %p218 = scmp.ne.s32.totalorder %s206, %s207
      %p219 = scmp.eq.s32.totalorder %s29, 2
      %p220 = por %p218, %p219
      %p222 = scmp.ne.s32.totalorder %s207, %s221
      %p223 = scmp.eq.s32.totalorder %s29, 0
      %p224 = por %p222, %p223
      %s225 = ssub.s32 %s23, %s30
      %p226 = scmp.eq.s32.totalorder %s225, 0
      %s228 = sadd.s32 %s227, 1
      %s229 = scalar_select %p226, %s227, %s228
      %p232 = pneg %p226
      %p233 = scmp.eq.s32.totalorder %s23, 2
      %p234 = por %p232, %p233
      %p235 = scmp.ne.s32.totalorder %s227, %s230
      %p236 = scmp.eq.s32.totalorder %s23, 0
      %p237 = por %p235, %p236
      %p238 = scmp.ne.s32.totalorder %s227, %s230
      %p239 = scmp.eq.s32.totalorder %s28, 2
      %p240 = por %p238, %p239
      %p241 = scmp.ne.s32.totalorder %s230, %s231
      %p242 = scmp.eq.s32.totalorder %s28, 0
      %p243 = por %p241, %p242
      %p244 = scmp.ne.s32.totalorder %s230, %s231
      %p245 = scmp.eq.s32.totalorder %s29, 2
      %p246 = por %p244, %p245
      %p248 = scmp.ne.s32.totalorder %s231, %s247
      %p249 = scmp.eq.s32.totalorder %s29, 0
      %p250 = por %p248, %p249
      %p251 = scmp.le.s32.totalorder 1, %s23
      %p252 = scmp.lt.s32.totalorder %s23, 4
      %p253 = pnand %p251, %p252
      %p254 = pneg %p253
      // Predicated region
      $region9: #{tpu_custom_call.1} parent=5 // pred_check
        _
      $region10: #{tpu_custom_call.1} parent=5 // pred_check_branch
        %256 = sbr.rel (%p253) target = $region12
      $region11: #{tpu_custom_call.1} parent=5 // pred_region
        %s257 = ssub.s32 %s23, 1
        // Predicated region
        $region13: #{tpu_custom_call.1} parent=11 // pred_check
          %p258 = pneg %p70
        $region14: #{tpu_custom_call.1} parent=11 // pred_check_branch
          %260 = sbr.rel (%p258) target = $region16
        $region15: #{tpu_custom_call.1} parent=11 // pred_region
          %s262 = ssub.s32 768, 768
          %263 = vsyncadd [#allocation6], %s262
          %s264 = sshll.u32 [#allocation5], 4
          %s265 = int_to_ptr.vmem [resolvable:$true] %s264
          %270 = dma.hbm_to_vmem [thread:$0]  %s1, 768, %s265, [#allocation6], 192, 192, 12
        $region16: #{tpu_custom_call.1} parent=11 // pred_fallthru
          _
        // Predicated region
        $region17: #{tpu_custom_call.1} parent=11 // pred_check
          %p271 = pneg %p91
        $region18: #{tpu_custom_call.1} parent=11 // pred_check_branch
          %273 = sbr.rel (%p271) target = $region20
        $region19: #{tpu_custom_call.1} parent=11 // pred_region
          _
        $region20: #{tpu_custom_call.1} parent=11 // pred_fallthru
          _
        // Predicated region
        $region21: #{tpu_custom_call.1} parent=11 // pred_check
          %p274 = pneg %p112
        $region22: #{tpu_custom_call.1} parent=11 // pred_check_branch
          %276 = sbr.rel (%p274) target = $region24
        $region23: #{tpu_custom_call.1} parent=11 // pred_region
          %s278 = ssub.s32 9216, 9216
          %279 = vsyncadd [#allocation6], %s278
          %s280 = sshll.u32 [#allocation7], 4
          %s281 = int_to_ptr.vmem [resolvable:$true] %s280
          %286 = dma.hbm_to_vmem [thread:$0]  %s3, 9216, %s281, [#allocation6], 192, 192, 12
        $region24: #{tpu_custom_call.1} parent=11 // pred_fallthru
          _
        // Predicated region
        $region25: #{tpu_custom_call.1} parent=11 // pred_check
          %p287 = pneg %p133
        $region26: #{tpu_custom_call.1} parent=11 // pred_check_branch
          %289 = sbr.rel (%p287) target = $region28
        $region27: #{tpu_custom_call.1} parent=11 // pred_region
          _
        $region28: #{tpu_custom_call.1} parent=11 // pred_fallthru
          _
        // Predicated region
        $region29: #{tpu_custom_call.1} parent=11 // pred_check
          %p290 = pneg %p154
        $region30: #{tpu_custom_call.1} parent=11 // pred_check_branch
          %292 = sbr.rel (%p290) target = $region32
        $region31: #{tpu_custom_call.1} parent=11 // pred_region
          %s294 = ssub.s32 12288, 12288
          %295 = vsyncadd [#allocation9], %s294
          %s296 = sshll.u32 [#allocation8], 4
          %s297 = int_to_ptr.vmem [resolvable:$true] %s296
          %302 = dma.hbm_to_vmem [thread:$0]  %s5, 12288, %s297, [#allocation9], 256, 256, 16
        $region32: #{tpu_custom_call.1} parent=11 // pred_fallthru
          _
        // Predicated region
        $region33: #{tpu_custom_call.1} parent=11 // pred_check
          %p303 = pneg %p175
        $region34: #{tpu_custom_call.1} parent=11 // pred_check_branch
          %305 = sbr.rel (%p303) target = $region36
        $region35: #{tpu_custom_call.1} parent=11 // pred_region
          _
        $region36: #{tpu_custom_call.1} parent=11 // pred_fallthru
          _
        // Predicated region
        $region37: #{tpu_custom_call.1} parent=11 // pred_check
          %p306 = pneg %p196
        $region38: #{tpu_custom_call.1} parent=11 // pred_check_branch
          %308 = sbr.rel (%p306) target = $region40
        $region39: #{tpu_custom_call.1} parent=11 // pred_region
          %s310 = ssub.s32 4096, 4096
          %311 = vsyncadd [#allocation9], %s310
          %s312 = sshll.u32 [#allocation10], 4
          %s313 = int_to_ptr.vmem [resolvable:$true] %s312
          %318 = dma.hbm_to_vmem [thread:$0]  %s7, 4096, %s313, [#allocation9], 64, 64, 4
        $region40: #{tpu_custom_call.1} parent=11 // pred_fallthru
          _
        // Predicated region
        $region41: #{tpu_custom_call.1} parent=11 // pred_check
          %p319 = pneg %p217
        $region42: #{tpu_custom_call.1} parent=11 // pred_check_branch
          %321 = sbr.rel (%p319) target = $region44
        $region43: #{tpu_custom_call.1} parent=11 // pred_region
          _
        $region44: #{tpu_custom_call.1} parent=11 // pred_fallthru
          _
      $region12: #{tpu_custom_call.1} parent=5 // pred_fallthru
        _
      %p322 = scmp.lt.s32.totalorder %s23, 3
      // Predicated region
      $region45: #{tpu_custom_call.1} parent=5 // pred_check
        %p323 = pneg %p322
      $region46: #{tpu_custom_call.1} parent=5 // pred_check_branch
        %325 = sbr.rel (%p323) target = $region48
      $region47: #{tpu_custom_call.1} parent=5 // pred_region
        // Predicated region
        $region49: #{tpu_custom_call.1} parent=47 // pred_check
          %p326 = pneg %p43
        $region50: #{tpu_custom_call.1} parent=47 // pred_check_branch
          %328 = sbr.rel (%p326) target = $region52
        $region51: #{tpu_custom_call.1} parent=47 // pred_region
          %s329 = sand.u32 %s33, 1
          %s330 = scalar_lea.sflag [#allocation3], %s329
          %s331 = sand.u32 %s33, 1
          %s332 = smul.addr %s331, 4
          %s333 = scalar_lea.vmem [#allocation2], %s332
          %s335 = ssub.s32 64, 64
          %336 = vsyncadd %s330, %s335
          %s337 = smul.addr %s23, 64
          %s338 = scalar_lea.hbm %s0, %s337
          %s340 = sshll.u32 %s333, 4
          %s341 = int_to_ptr.vmem [resolvable:$true] %s340
          %343 = dma.hbm_to_vmem [thread:$0]  %s338, 64, %s341, %s330
        $region52: #{tpu_custom_call.1} parent=47 // pred_fallthru
          _
      $region48: #{tpu_custom_call.1} parent=5 // pred_fallthru
        _
      %p344 = scmp.le.s32.totalorder 1, %s23
      %p345 = scmp.lt.s32.totalorder %s23, 4
      %p346 = pnand %p344, %p345
      %p347 = pneg %p346
      // Predicated region
      $region53: #{tpu_custom_call.1} parent=5 // pred_check
        _
      $region54: #{tpu_custom_call.1} parent=5 // pred_check_branch
        %349 = sbr.rel (%p346) target = $region56
      $region55: #{tpu_custom_call.1} parent=5 // pred_region
        %s350 = ssub.s32 %s23, 1
        %s351 = sand.u32 %s36, 1
        %s352 = scalar_lea.sflag [#allocation3], %s351
        %s353 = sand.u32 %s36, 1
        %s354 = smul.addr %s353, 4
        %s355 = scalar_lea.vmem [#allocation2], %s354
        // Predicated region
        $region57: #{tpu_custom_call.1} parent=55 // pred_check
          %p356 = pneg %p49
        $region58: #{tpu_custom_call.1} parent=55 // pred_check_branch
          %358 = sbr.rel (%p356) target = $region60
        $region59: #{tpu_custom_call.1} parent=55 // pred_region
          %359 = dma.done %s352, 64
        $region60: #{tpu_custom_call.1} parent=55 // pred_fallthru
          _
        // Predicated region
        $region61: #{tpu_custom_call.1} parent=55 // pred_check
          %p360 = pneg %p70
        $region62: #{tpu_custom_call.1} parent=55 // pred_check_branch
          %362 = sbr.rel (%p360) target = $region64
        $region63: #{tpu_custom_call.1} parent=55 // pred_region
          %363 = dma.done [#allocation6], 768
        $region64: #{tpu_custom_call.1} parent=55 // pred_fallthru
          _
        // Predicated region
        $region65: #{tpu_custom_call.1} parent=55 // pred_check
          %p364 = pneg %p112
        $region66: #{tpu_custom_call.1} parent=55 // pred_check_branch
          %366 = sbr.rel (%p364) target = $region68
        $region67: #{tpu_custom_call.1} parent=55 // pred_region
          %367 = dma.done [#allocation6], 9216
        $region68: #{tpu_custom_call.1} parent=55 // pred_fallthru
          _
        // Predicated region
        $region69: #{tpu_custom_call.1} parent=55 // pred_check
          %p368 = pneg %p154
        $region70: #{tpu_custom_call.1} parent=55 // pred_check_branch
          %370 = sbr.rel (%p368) target = $region72
        $region71: #{tpu_custom_call.1} parent=55 // pred_region
          %371 = dma.done [#allocation9], 12288
        $region72: #{tpu_custom_call.1} parent=55 // pred_fallthru
          _
        // Predicated region
        $region73: #{tpu_custom_call.1} parent=55 // pred_check
          %p372 = pneg %p196
        $region74: #{tpu_custom_call.1} parent=55 // pred_check_branch
          %374 = sbr.rel (%p372) target = $region76
        $region75: #{tpu_custom_call.1} parent=55 // pred_region
          %375 = dma.done [#allocation9], 4096
        $region76: #{tpu_custom_call.1} parent=55 // pred_fallthru
          _
        %s376 = sand.u32 %s36, 1
        %s377 = scalar_lea.sflag [#allocation3], %s376
        %s378 = sand.u32 %s36, 1
        %s379 = smul.addr %s378, 4
        %s380 = scalar_lea.vmem [#allocation2], %s379
        %p381 = pneg %p49
        %p382 = pneg %p46
        %p383 = pneg %p70
        %p384 = pneg %p67
        %p385 = pneg %p91
        %p386 = pneg %p88
        %p387 = pneg %p112
        %p388 = pneg %p109
        %p389 = pneg %p133
        %p390 = pneg %p130
        %p391 = pneg %p154
        %p392 = pneg %p151
        %p393 = pneg %p175
        %p394 = pneg %p172
        %p395 = pneg %p196
        %p396 = pneg %p193
        %p397 = pneg %p217
        %p398 = pneg %p214
        %p399 = pneg %p243
        %p400 = pneg %p240
        %s401 = sand.u32 %s230, 1
        %s402 = scalar_lea.sflag [#allocation4], %s401
        %s403 = sand.u32 %s230, 1
        %s404 = smul.addr %s403, 8
        %s405 = scalar_lea.vmem [#allocation11], %s404
        %v407 = vld [vmem:[%s355] sm:$0xf]
        %v408 = vld [vmem:[#allocation5] sm:$0xff]
        %v409 = vld [vmem:[#allocation5 + $0x8] sm:$0xf]
        %v410 = vld [vmem:[#allocation5 + $0xc] sm:$0xff]
        %v411 = vld [vmem:[#allocation5 + $0x14] sm:$0xf]
        %v412 = vld [vmem:[#allocation5 + $0x18] sm:$0xff]
        %v413 = vld [vmem:[#allocation5 + $0x20] sm:$0xf]
        %v414 = vld [vmem:[#allocation5 + $0x24] sm:$0xff]
        %v415 = vld [vmem:[#allocation5 + $0x2c] sm:$0xf]
        %v416 = vld [vmem:[%s2] sm:$0x7]
        %v418 = vlaneseq
        %v419 = vshrl.u32 %v418, 7
        %v420 = vsub.s32 0, %v419
        %v421 = vrot.slane %v416, %v420
        %v422 = vlaneseq
        %v423 = vshrl.u32 %v422, 7
        %v424 = vsub.s32 1, %v423
        %v425 = vrot.slane %v416, %v424
        %v426 = vlaneseq
        %v427 = vshrl.u32 %v426, 7
        %v428 = vsub.s32 2, %v427
        %v429 = vrot.slane %v416, %v428
        %v441 = vunpack.c.l.b16 %v408
        %v442 = vunpack.c.h.b16 %v408
        %v443 = vunpack.c.l.b16 %v409
        %v444 = vunpack.c.l.b16 %v410
        %v445 = vunpack.c.h.b16 %v410
        %v446 = vunpack.c.l.b16 %v411
        %v447 = vunpack.c.l.b16 %v412
        %v448 = vunpack.c.h.b16 %v412
        %v449 = vunpack.c.l.b16 %v413
        %v450 = vunpack.c.l.b16 %v414
        %v451 = vunpack.c.h.b16 %v414
        %v452 = vunpack.c.l.b16 %v415
        %v453 = vpack.c.b16 %v444, %v441
        %v454 = vpack.c.b16 %v445, %v442
        %v455 = vpack.c.b16 %v446, %v443
        %v456 = vpack.c.b16 %v450, %v447
        %v457 = vpack.c.b16 %v451, %v448
        %v458 = vpack.c.b16 %v452, %v449
        %vm465 = vcmask 261120
        %v467 = vsel %vm465, %v407, 0
        %469 = vmatprep.subr.bf16.mxu0 %v454
        %470 = vmatpush1.bf16.msra.mxu0 %v453
        %471 = vmatprep.subr.bf16.mxu0 %v457
        %472 = vmatpush1.bf16.msra.mxu0 %v456
        %473 = vmatprep.subr.bf16.mxu0 0
        %474 = vmatpush1.bf16.msra.mxu0 0
        %475 = vmatprep.subr.bf16.mxu0 0
        %476 = vmatpush1.bf16.msra.mxu0 0
        %477 = vmatprep.subr.bf16.mxu0 0
        %478 = vmatpush1.bf16.msra.mxu0 0
        %479 = vmatprep.subr.bf16.mxu0 0
        %480 = vmatpush1.bf16.msra.mxu0 0
        %481 = vmatprep.subr.bf16.mxu0 0
        %482 = vmatpush1.bf16.msra.mxu0 0
        %483 = vmatprep.subr.bf16.mxu0 0
        %484 = vmatpush1.bf16.msra.mxu0 0
        %485 = vmatprep.subr.bf16.mxu0 0
        %486 = vmatpush1.bf16.msra.mxu0 0
        %487 = vmatprep.subr.bf16.mxu0 0
        %488 = vmatpush1.bf16.msra.mxu0 0
        %489 = vmatprep.subr.bf16.mxu0 0
        %490 = vmatpush1.bf16.msra.mxu0 0
        %491 = vmatprep.subr.bf16.mxu0 0
        %492 = vmatpush1.bf16.msra.mxu0 0
        %493 = vmatprep.subr.bf16.mxu0 0
        %494 = vmatpush1.bf16.msra.mxu0 0
        %495 = vmatprep.subr.bf16.mxu0 0
        %496 = vmatpush1.bf16.msra.mxu0 0
        %497 = vmatprep.subr.bf16.mxu0 0
        %498 = vmatpush1.bf16.msra.mxu0 0
        %499 = vmatprep.subr.bf16.mxu0 0
        %500 = vmatpush1.bf16.msra.mxu0 0
        %501 = vmatprep.mubr.bf16.mxu0 0
        %502 = vmatmul.mubr.bf16.gmra.mrb[0].mxu0 %v467
        %v503 = vpop.f32.mrb[0].mxu0
        %v504 = vadd.f32 %v421, %v503
        %v505 = vpop.f32.mrb[0].mxu0
        %v506 = vadd.f32 %v425, %v505
        %v507 = vpop.f32.mrb[0].mxu0
        %v508 = vpop.f32.mrb[0].mxu0
        %509 = vdwg.mxu0
        %510 = vmatprep.subr.bf16.mxu0 0
        %511 = vmatpush1.bf16.msra.mxu0 %v455
        %512 = vmatprep.subr.bf16.mxu0 0
        %513 = vmatpush1.bf16.msra.mxu0 %v458
        %514 = vmatprep.subr.bf16.mxu0 0
        %515 = vmatpush1.bf16.msra.mxu0 0
        %516 = vmatprep.subr.bf16.mxu0 0
        %517 = vmatpush1.bf16.msra.mxu0 0
        %518 = vmatprep.subr.bf16.mxu0 0
        %519 = vmatpush1.bf16.msra.mxu0 0
        %520 = vmatprep.subr.bf16.mxu0 0
        %521 = vmatpush1.bf16.msra.mxu0 0
        %522 = vmatprep.subr.bf16.mxu0 0
        %523 = vmatpush1.bf16.msra.mxu0 0
        %524 = vmatprep.subr.bf16.mxu0 0
        %525 = vmatpush1.bf16.msra.mxu0 0
        %526 = vmatprep.subr.bf16.mxu0 0
        %527 = vmatpush1.bf16.msra.mxu0 0
        %528 = vmatprep.subr.bf16.mxu0 0
        %529 = vmatpush1.bf16.msra.mxu0 0
        %530 = vmatprep.subr.bf16.mxu0 0
        %531 = vmatpush1.bf16.msra.mxu0 0
        %532 = vmatprep.subr.bf16.mxu0 0
        %533 = vmatpush1.bf16.msra.mxu0 0
        %534 = vmatprep.subr.bf16.mxu0 0
        %535 = vmatpush1.bf16.msra.mxu0 0
        %536 = vmatprep.subr.bf16.mxu0 0
        %537 = vmatpush1.bf16.msra.mxu0 0
        %538 = vmatprep.subr.bf16.mxu0 0
        %539 = vmatpush1.bf16.msra.mxu0 0
        %540 = vmatprep.subr.bf16.mxu0 0
        %541 = vmatpush1.bf16.msra.mxu0 0
        %542 = vmatprep.mubr.bf16.mxu0 0
        %543 = vmatmul.mubr.bf16.gmra.mrb[0].mxu0 %v467
        %v544 = vpop.f32.mrb[0].mxu0
        %v545 = vadd.f32 %v429, %v544
        %v546 = vpop.f32.mrb[0].mxu0
        %v547 = vpop.f32.mrb[0].mxu0
        %v548 = vpop.f32.mrb[0].mxu0
        %549 = vdwg.mxu0
        %v550 = vpack.c.bf16 %v504, %v504
        %v551 = vpack.c.bf16 %v506, %v506
        %v552 = vpack.c.bf16 %v545, %v545
        %v553 = vmax.bf16 %v550, 0
        %v554 = vmax.bf16 %v551, 0
        %v555 = vmax.bf16 %v552, 0
        %v556 = vld [vmem:[#allocation7] sm:$0xff]
        %v557 = vld [vmem:[#allocation7 + $0x8] sm:$0xf]
        %v558 = vld [vmem:[#allocation7 + $0xc] sm:$0xff]
        %v559 = vld [vmem:[#allocation7 + $0x14] sm:$0xf]
        %v560 = vld [vmem:[#allocation7 + $0x18] sm:$0xff]
        %v561 = vld [vmem:[#allocation7 + $0x20] sm:$0xf]
        %v562 = vld [vmem:[#allocation7 + $0x24] sm:$0xff]
        %v563 = vld [vmem:[#allocation7 + $0x2c] sm:$0xf]
        %v564 = vld [vmem:[#allocation7 + $0x30] sm:$0xff]
        %v565 = vld [vmem:[#allocation7 + $0x38] sm:$0xf]
        %v566 = vld [vmem:[#allocation7 + $0x3c] sm:$0xff]
        %v567 = vld [vmem:[#allocation7 + $0x44] sm:$0xf]
        %v568 = vld [vmem:[#allocation7 + $0x48] sm:$0xff]
        %v569 = vld [vmem:[#allocation7 + $0x50] sm:$0xf]
        %v570 = vld [vmem:[#allocation7 + $0x54] sm:$0xff]
        %v571 = vld [vmem:[#allocation7 + $0x5c] sm:$0xf]
        %v572 = vld [vmem:[#allocation7 + $0x60] sm:$0xff]
        %v573 = vld [vmem:[#allocation7 + $0x68] sm:$0xf]
        %v574 = vld [vmem:[#allocation7 + $0x6c] sm:$0xff]
        %v575 = vld [vmem:[#allocation7 + $0x74] sm:$0xf]
        %v576 = vld [vmem:[#allocation7 + $0x78] sm:$0xff]
        %v577 = vld [vmem:[#allocation7 + $0x80] sm:$0xf]
        %v578 = vld [vmem:[#allocation7 + $0x84] sm:$0xff]
        %v579 = vld [vmem:[#allocation7 + $0x8c] sm:$0xf]
        %v580 = vld [vmem:[#allocation7 + $0x90] sm:$0xff]
        %v581 = vld [vmem:[#allocation7 + $0x98] sm:$0xf]
        %v582 = vld [vmem:[#allocation7 + $0x9c] sm:$0xff]
        %v583 = vld [vmem:[#allocation7 + $0xa4] sm:$0xf]
        %v584 = vld [vmem:[#allocation7 + $0xa8] sm:$0xff]
        %v585 = vld [vmem:[#allocation7 + $0xb0] sm:$0xf]
        %v586 = vld [vmem:[#allocation7 + $0xb4] sm:$0xff]
        %v587 = vld [vmem:[#allocation7 + $0xbc] sm:$0xf]
        %v588 = vld [vmem:[#allocation7 + $0xc0] sm:$0xff]
        %v589 = vld [vmem:[#allocation7 + $0xc8] sm:$0xf]
        %v590 = vld [vmem:[#allocation7 + $0xcc] sm:$0xff]
        %v591 = vld [vmem:[#allocation7 + $0xd4] sm:$0xf]
        %v592 = vld [vmem:[#allocation7 + $0xd8] sm:$0xff]
        %v593 = vld [vmem:[#allocation7 + $0xe0] sm:$0xf]
        %v594 = vld [vmem:[#allocation7 + $0xe4] sm:$0xff]
        %v595 = vld [vmem:[#allocation7 + $0xec] sm:$0xf]
        %v596 = vld [vmem:[#allocation7 + $0xf0] sm:$0xff]
        %v597 = vld [vmem:[#allocation7 + $0xf8] sm:$0xf]
        %v598 = vld [vmem:[#allocation7 + $0xfc] sm:$0xff]
        %v599 = vld [vmem:[#allocation7 + $0x104] sm:$0xf]
        %v600 = vld [vmem:[#allocation7 + $0x108] sm:$0xff]
        %v601 = vld [vmem:[#allocation7 + $0x110] sm:$0xf]
        %v602 = vld [vmem:[#allocation7 + $0x114] sm:$0xff]
        %v603 = vld [vmem:[#allocation7 + $0x11c] sm:$0xf]
        %v604 = vld [vmem:[#allocation7 + $0x120] sm:$0xff]
        %v605 = vld [vmem:[#allocation7 + $0x128] sm:$0xf]
        %v606 = vld [vmem:[#allocation7 + $0x12c] sm:$0xff]
        %v607 = vld [vmem:[#allocation7 + $0x134] sm:$0xf]
        %v608 = vld [vmem:[#allocation7 + $0x138] sm:$0xff]
        %v609 = vld [vmem:[#allocation7 + $0x140] sm:$0xf]
        %v610 = vld [vmem:[#allocation7 + $0x144] sm:$0xff]
        %v611 = vld [vmem:[#allocation7 + $0x14c] sm:$0xf]
        %v612 = vld [vmem:[#allocation7 + $0x150] sm:$0xff]
        %v613 = vld [vmem:[#allocation7 + $0x158] sm:$0xf]
        %v614 = vld [vmem:[#allocation7 + $0x15c] sm:$0xff]
        %v615 = vld [vmem:[#allocation7 + $0x164] sm:$0xf]
        %v616 = vld [vmem:[#allocation7 + $0x168] sm:$0xff]
        %v617 = vld [vmem:[#allocation7 + $0x170] sm:$0xf]
        %v618 = vld [vmem:[#allocation7 + $0x174] sm:$0xff]
        %v619 = vld [vmem:[#allocation7 + $0x17c] sm:$0xf]
        %v620 = vld [vmem:[#allocation7 + $0x180] sm:$0xff]
        %v621 = vld [vmem:[#allocation7 + $0x188] sm:$0xf]
        %v622 = vld [vmem:[#allocation7 + $0x18c] sm:$0xff]
        %v623 = vld [vmem:[#allocation7 + $0x194] sm:$0xf]
        %v624 = vld [vmem:[#allocation7 + $0x198] sm:$0xff]
        %v625 = vld [vmem:[#allocation7 + $0x1a0] sm:$0xf]
        %v626 = vld [vmem:[#allocation7 + $0x1a4] sm:$0xff]
        %v627 = vld [vmem:[#allocation7 + $0x1ac] sm:$0xf]
        %v628 = vld [vmem:[#allocation7 + $0x1b0] sm:$0xff]
        %v629 = vld [vmem:[#allocation7 + $0x1b8] sm:$0xf]
        %v630 = vld [vmem:[#allocation7 + $0x1bc] sm:$0xff]
        %v631 = vld [vmem:[#allocation7 + $0x1c4] sm:$0xf]
        %v632 = vld [vmem:[#allocation7 + $0x1c8] sm:$0xff]
        %v633 = vld [vmem:[#allocation7 + $0x1d0] sm:$0xf]
        %v634 = vld [vmem:[#allocation7 + $0x1d4] sm:$0xff]
        %v635 = vld [vmem:[#allocation7 + $0x1dc] sm:$0xf]
        %v636 = vld [vmem:[#allocation7 + $0x1e0] sm:$0xff]
        %v637 = vld [vmem:[#allocation7 + $0x1e8] sm:$0xf]
        %v638 = vld [vmem:[#allocation7 + $0x1ec] sm:$0xff]
        %v639 = vld [vmem:[#allocation7 + $0x1f4] sm:$0xf]
        %v640 = vld [vmem:[#allocation7 + $0x1f8] sm:$0xff]
        %v641 = vld [vmem:[#allocation7 + $0x200] sm:$0xf]
        %v642 = vld [vmem:[#allocation7 + $0x204] sm:$0xff]
        %v643 = vld [vmem:[#allocation7 + $0x20c] sm:$0xf]
        %v644 = vld [vmem:[#allocation7 + $0x210] sm:$0xff]
        %v645 = vld [vmem:[#allocation7 + $0x218] sm:$0xf]
        %v646 = vld [vmem:[#allocation7 + $0x21c] sm:$0xff]
        %v647 = vld [vmem:[#allocation7 + $0x224] sm:$0xf]
        %v648 = vld [vmem:[#allocation7 + $0x228] sm:$0xff]
        %v649 = vld [vmem:[#allocation7 + $0x230] sm:$0xf]
        %v650 = vld [vmem:[#allocation7 + $0x234] sm:$0xff]
        %v651 = vld [vmem:[#allocation7 + $0x23c] sm:$0xf]
        %v652 = vld [vmem:[%s4] sm:$0x7]
        %v654 = vlaneseq
        %v655 = vshrl.u32 %v654, 7
        %v656 = vsub.s32 0, %v655
        %v657 = vrot.slane %v652, %v656
        %v658 = vlaneseq
        %v659 = vshrl.u32 %v658, 7
        %v660 = vsub.s32 1, %v659
        %v661 = vrot.slane %v652, %v660
        %v662 = vlaneseq
        %v663 = vshrl.u32 %v662, 7
        %v664 = vsub.s32 2, %v663
        %v665 = vrot.slane %v652, %v664
        %v765 = vunpack.c.l.b16 %v556
        %v766 = vunpack.c.h.b16 %v556
        %v767 = vunpack.c.l.b16 %v557
        %v768 = vunpack.c.l.b16 %v558
        %v769 = vunpack.c.h.b16 %v558
        %v770 = vunpack.c.l.b16 %v559
        %v771 = vunpack.c.l.b16 %v560
        %v772 = vunpack.c.h.b16 %v560
        %v773 = vunpack.c.l.b16 %v561
        %v774 = vunpack.c.l.b16 %v562
        %v775 = vunpack.c.h.b16 %v562
        %v776 = vunpack.c.l.b16 %v563
        %v777 = vunpack.c.l.b16 %v564
        %v778 = vunpack.c.h.b16 %v564
        %v779 = vunpack.c.l.b16 %v565
        %v780 = vunpack.c.l.b16 %v566
        %v781 = vunpack.c.h.b16 %v566
        %v782 = vunpack.c.l.b16 %v567
        %v783 = vunpack.c.l.b16 %v568
        %v784 = vunpack.c.h.b16 %v568
        %v785 = vunpack.c.l.b16 %v569
        %v786 = vunpack.c.l.b16 %v570
        %v787 = vunpack.c.h.b16 %v570
        %v788 = vunpack.c.l.b16 %v571
        %v789 = vunpack.c.l.b16 %v572
        %v790 = vunpack.c.h.b16 %v572
        %v791 = vunpack.c.l.b16 %v573
        %v792 = vunpack.c.l.b16 %v574
        %v793 = vunpack.c.h.b16 %v574
        %v794 = vunpack.c.l.b16 %v575
        %v795 = vunpack.c.l.b16 %v576
        %v796 = vunpack.c.h.b16 %v576
        %v797 = vunpack.c.l.b16 %v577
        %v798 = vunpack.c.l.b16 %v578
        %v799 = vunpack.c.h.b16 %v578
        %v800 = vunpack.c.l.b16 %v579
        %v801 = vunpack.c.l.b16 %v580
        %v802 = vunpack.c.h.b16 %v580
        %v803 = vunpack.c.l.b16 %v581
        %v804 = vunpack.c.l.b16 %v582
        %v805 = vunpack.c.h.b16 %v582
        %v806 = vunpack.c.l.b16 %v583
        %v807 = vunpack.c.l.b16 %v584
        %v808 = vunpack.c.h.b16 %v584
        %v809 = vunpack.c.l.b16 %v585
        %v810 = vunpack.c.l.b16 %v586
        %v811 = vunpack.c.h.b16 %v586
        %v812 = vunpack.c.l.b16 %v587
        %v813 = vunpack.c.l.b16 %v588
        %v814 = vunpack.c.h.b16 %v588
        %v815 = vunpack.c.l.b16 %v589
        %v816 = vunpack.c.l.b16 %v590
        %v817 = vunpack.c.h.b16 %v590
        %v818 = vunpack.c.l.b16 %v591
        %v819 = vunpack.c.l.b16 %v592
        %v820 = vunpack.c.h.b16 %v592
        %v821 = vunpack.c.l.b16 %v593
        %v822 = vunpack.c.l.b16 %v594
        %v823 = vunpack.c.h.b16 %v594
        %v824 = vunpack.c.l.b16 %v595
        %v825 = vunpack.c.l.b16 %v596
        %v826 = vunpack.c.h.b16 %v596
        %v827 = vunpack.c.l.b16 %v597
        %v828 = vunpack.c.l.b16 %v598
        %v829 = vunpack.c.h.b16 %v598
        %v830 = vunpack.c.l.b16 %v599
        %v831 = vunpack.c.l.b16 %v600
        %v832 = vunpack.c.h.b16 %v600
        %v833 = vunpack.c.l.b16 %v601
        %v834 = vunpack.c.l.b16 %v602
        %v835 = vunpack.c.h.b16 %v602
        %v836 = vunpack.c.l.b16 %v603
        %v837 = vunpack.c.l.b16 %v604
        %v838 = vunpack.c.h.b16 %v604
        %v839 = vunpack.c.l.b16 %v605
        %v840 = vunpack.c.l.b16 %v606
        %v841 = vunpack.c.h.b16 %v606
        %v842 = vunpack.c.l.b16 %v607
        %v843 = vunpack.c.l.b16 %v608
        %v844 = vunpack.c.h.b16 %v608
        %v845 = vunpack.c.l.b16 %v609
        %v846 = vunpack.c.l.b16 %v610
        %v847 = vunpack.c.h.b16 %v610
        %v848 = vunpack.c.l.b16 %v611
        %v849 = vunpack.c.l.b16 %v612
        %v850 = vunpack.c.h.b16 %v612
        %v851 = vunpack.c.l.b16 %v613
        %v852 = vunpack.c.l.b16 %v614
        %v853 = vunpack.c.h.b16 %v614
        %v854 = vunpack.c.l.b16 %v615
        %v855 = vunpack.c.l.b16 %v616
        %v856 = vunpack.c.h.b16 %v616
        %v857 = vunpack.c.l.b16 %v617
        %v858 = vunpack.c.l.b16 %v618
        %v859 = vunpack.c.h.b16 %v618
        %v860 = vunpack.c.l.b16 %v619
        %v861 = vunpack.c.l.b16 %v620
        %v862 = vunpack.c.h.b16 %v620
        %v863 = vunpack.c.l.b16 %v621
        %v864 = vunpack.c.l.b16 %v622
        %v865 = vunpack.c.h.b16 %v622
        %v866 = vunpack.c.l.b16 %v623
        %v867 = vunpack.c.l.b16 %v624
        %v868 = vunpack.c.h.b16 %v624
        %v869 = vunpack.c.l.b16 %v625
        %v870 = vunpack.c.l.b16 %v626
        %v871 = vunpack.c.h.b16 %v626
        %v872 = vunpack.c.l.b16 %v627
        %v873 = vunpack.c.l.b16 %v628
        %v874 = vunpack.c.h.b16 %v628
        %v875 = vunpack.c.l.b16 %v629
        %v876 = vunpack.c.l.b16 %v630
        %v877 = vunpack.c.h.b16 %v630
        %v878 = vunpack.c.l.b16 %v631
        %v879 = vunpack.c.l.b16 %v632
        %v880 = vunpack.c.h.b16 %v632
        %v881 = vunpack.c.l.b16 %v633
        %v882 = vunpack.c.l.b16 %v634
        %v883 = vunpack.c.h.b16 %v634
        %v884 = vunpack.c.l.b16 %v635
        %v885 = vunpack.c.l.b16 %v636
        %v886 = vunpack.c.h.b16 %v636
        %v887 = vunpack.c.l.b16 %v637
        %v888 = vunpack.c.l.b16 %v638
        %v889 = vunpack.c.h.b16 %v638
        %v890 = vunpack.c.l.b16 %v639
        %v891 = vunpack.c.l.b16 %v640
        %v892 = vunpack.c.h.b16 %v640
        %v893 = vunpack.c.l.b16 %v641
        %v894 = vunpack.c.l.b16 %v642
        %v895 = vunpack.c.h.b16 %v642
        %v896 = vunpack.c.l.b16 %v643
        %v897 = vunpack.c.l.b16 %v644
        %v898 = vunpack.c.h.b16 %v644
        %v899 = vunpack.c.l.b16 %v645
        %v900 = vunpack.c.l.b16 %v646
        %v901 = vunpack.c.h.b16 %v646
        %v902 = vunpack.c.l.b16 %v647
        %v903 = vunpack.c.l.b16 %v648
        %v904 = vunpack.c.h.b16 %v648
        %v905 = vunpack.c.l.b16 %v649
        %v906 = vunpack.c.l.b16 %v650
        %v907 = vunpack.c.h.b16 %v650
        %v908 = vunpack.c.l.b16 %v651
        %v909 = vpack.c.b16 %v768, %v765
        %v910 = vpack.c.b16 %v769, %v766
        %v911 = vpack.c.b16 %v770, %v767
        %v912 = vpack.c.b16 %v774, %v771
        %v913 = vpack.c.b16 %v775, %v772
        %v914 = vpack.c.b16 %v776, %v773
        %v915 = vpack.c.b16 %v780, %v777
        %v916 = vpack.c.b16 %v781, %v778
        %v917 = vpack.c.b16 %v782, %v779
        %v918 = vpack.c.b16 %v786, %v783
        %v919 = vpack.c.b16 %v787, %v784
        %v920 = vpack.c.b16 %v788, %v785
        %v921 = vpack.c.b16 %v792, %v789
        %v922 = vpack.c.b16 %v793, %v790
        %v923 = vpack.c.b16 %v794, %v791
        %v924 = vpack.c.b16 %v798, %v795
        %v925 = vpack.c.b16 %v799, %v796
        %v926 = vpack.c.b16 %v800, %v797
        %v927 = vpack.c.b16 %v804, %v801
        %v928 = vpack.c.b16 %v805, %v802
        %v929 = vpack.c.b16 %v806, %v803
        %v930 = vpack.c.b16 %v810, %v807
        %v931 = vpack.c.b16 %v811, %v808
        %v932 = vpack.c.b16 %v812, %v809
        %v933 = vpack.c.b16 %v816, %v813
        %v934 = vpack.c.b16 %v817, %v814
        %v935 = vpack.c.b16 %v818, %v815
        %v936 = vpack.c.b16 %v822, %v819
        %v937 = vpack.c.b16 %v823, %v820
        %v938 = vpack.c.b16 %v824, %v821
        %v939 = vpack.c.b16 %v828, %v825
        %v940 = vpack.c.b16 %v829, %v826
        %v941 = vpack.c.b16 %v830, %v827
        %v942 = vpack.c.b16 %v834, %v831
        %v943 = vpack.c.b16 %v835, %v832
        %v944 = vpack.c.b16 %v836, %v833
        %v945 = vpack.c.b16 %v840, %v837
        %v946 = vpack.c.b16 %v841, %v838
        %v947 = vpack.c.b16 %v842, %v839
        %v948 = vpack.c.b16 %v846, %v843
        %v949 = vpack.c.b16 %v847, %v844
        %v950 = vpack.c.b16 %v848, %v845
        %v951 = vpack.c.b16 %v852, %v849
        %v952 = vpack.c.b16 %v853, %v850
        %v953 = vpack.c.b16 %v854, %v851
        %v954 = vpack.c.b16 %v858, %v855
        %v955 = vpack.c.b16 %v859, %v856
        %v956 = vpack.c.b16 %v860, %v857
        %v957 = vpack.c.b16 %v864, %v861
        %v958 = vpack.c.b16 %v865, %v862
        %v959 = vpack.c.b16 %v866, %v863
        %v960 = vpack.c.b16 %v870, %v867
        %v961 = vpack.c.b16 %v871, %v868
        %v962 = vpack.c.b16 %v872, %v869
        %v963 = vpack.c.b16 %v876, %v873
        %v964 = vpack.c.b16 %v877, %v874
        %v965 = vpack.c.b16 %v878, %v875
        %v966 = vpack.c.b16 %v882, %v879
        %v967 = vpack.c.b16 %v883, %v880
        %v968 = vpack.c.b16 %v884, %v881
        %v969 = vpack.c.b16 %v888, %v885
        %v970 = vpack.c.b16 %v889, %v886
        %v971 = vpack.c.b16 %v890, %v887
        %v972 = vpack.c.b16 %v894, %v891
        %v973 = vpack.c.b16 %v895, %v892
        %v974 = vpack.c.b16 %v896, %v893
        %v975 = vpack.c.b16 %v900, %v897
        %v976 = vpack.c.b16 %v901, %v898
        %v977 = vpack.c.b16 %v902, %v899
        %v978 = vpack.c.b16 %v906, %v903
        %v979 = vpack.c.b16 %v907, %v904
        %v980 = vpack.c.b16 %v908, %v905
        %1053 = vmatprep.subr.bf16.mxu0 %v910
        %1054 = vmatpush1.bf16.msra.mxu0 %v909
        %1055 = vmatprep.subr.bf16.mxu0 %v913
        %1056 = vmatpush1.bf16.msra.mxu0 %v912
        %1057 = vmatprep.subr.bf16.mxu0 %v916
        %1058 = vmatpush1.bf16.msra.mxu0 %v915
        %1059 = vmatprep.subr.bf16.mxu0 %v919
        %1060 = vmatpush1.bf16.msra.mxu0 %v918
        %1061 = vmatprep.subr.bf16.mxu0 %v922
        %1062 = vmatpush1.bf16.msra.mxu0 %v921
        %1063 = vmatprep.subr.bf16.mxu0 %v925
        %1064 = vmatpush1.bf16.msra.mxu0 %v924
        %1065 = vmatprep.subr.bf16.mxu0 %v928
        %1066 = vmatpush1.bf16.msra.mxu0 %v927
        %1067 = vmatprep.subr.bf16.mxu0 %v931
        %1068 = vmatpush1.bf16.msra.mxu0 %v930
        %1069 = vmatprep.subr.bf16.mxu0 %v934
        %1070 = vmatpush1.bf16.msra.mxu0 %v933
        %1071 = vmatprep.subr.bf16.mxu0 %v937
        %1072 = vmatpush1.bf16.msra.mxu0 %v936
        %1073 = vmatprep.subr.bf16.mxu0 %v940
        %1074 = vmatpush1.bf16.msra.mxu0 %v939
        %1075 = vmatprep.subr.bf16.mxu0 %v943
        %1076 = vmatpush1.bf16.msra.mxu0 %v942
        %1077 = vmatprep.subr.bf16.mxu0 %v946
        %1078 = vmatpush1.bf16.msra.mxu0 %v945
        %1079 = vmatprep.subr.bf16.mxu0 %v949
        %1080 = vmatpush1.bf16.msra.mxu0 %v948
        %1081 = vmatprep.subr.bf16.mxu0 %v952
        %1082 = vmatpush1.bf16.msra.mxu0 %v951
        %1083 = vmatprep.subr.bf16.mxu0 %v955
        %1084 = vmatpush1.bf16.msra.mxu0 %v954
        %1085 = vmatprep.mubr.bf16.mxu0 %v554
        %1086 = vmatmul.mubr.bf16.gmra.mrb[0].mxu0 %v553
        %v1087 = vpop.f32.mrb[0].mxu0
        %v1088 = vadd.f32 %v657, %v1087
        %v1089 = vpop.f32.mrb[0].mxu0
        %v1090 = vadd.f32 %v661, %v1089
        %v1091 = vpop.f32.mrb[0].mxu0
        %v1092 = vpop.f32.mrb[0].mxu0
        %1093 = vdwg.mxu0
        %1094 = vmatprep.subr.bf16.mxu0 %v958
        %1095 = vmatpush1.bf16.msra.mxu0 %v957
        %1096 = vmatprep.subr.bf16.mxu0 %v961
        %1097 = vmatpush1.bf16.msra.mxu0 %v960
        %1098 = vmatprep.subr.bf16.mxu0 %v964
        %1099 = vmatpush1.bf16.msra.mxu0 %v963
        %1100 = vmatprep.subr.bf16.mxu0 %v967
        %1101 = vmatpush1.bf16.msra.mxu0 %v966
        %1102 = vmatprep.subr.bf16.mxu0 %v970
        %1103 = vmatpush1.bf16.msra.mxu0 %v969
        %1104 = vmatprep.subr.bf16.mxu0 %v973
        %1105 = vmatpush1.bf16.msra.mxu0 %v972
        %1106 = vmatprep.subr.bf16.mxu0 %v976
        %1107 = vmatpush1.bf16.msra.mxu0 %v975
        %1108 = vmatprep.subr.bf16.mxu0 %v979
        %1109 = vmatpush1.bf16.msra.mxu0 %v978
        %1110 = vmatprep.subr.bf16.mxu0 0
        %1111 = vmatpush1.bf16.msra.mxu0 0
        %1112 = vmatprep.subr.bf16.mxu0 0
        %1113 = vmatpush1.bf16.msra.mxu0 0
        %1114 = vmatprep.subr.bf16.mxu0 0
        %1115 = vmatpush1.bf16.msra.mxu0 0
        %1116 = vmatprep.subr.bf16.mxu0 0
        %1117 = vmatpush1.bf16.msra.mxu0 0
        %1118 = vmatprep.subr.bf16.mxu0 0
        %1119 = vmatpush1.bf16.msra.mxu0 0
        %1120 = vmatprep.subr.bf16.mxu0 0
        %1121 = vmatpush1.bf16.msra.mxu0 0
        %1122 = vmatprep.subr.bf16.mxu0 0
        %1123 = vmatpush1.bf16.msra.mxu0 0
        %1124 = vmatprep.subr.bf16.mxu0 0
        %1125 = vmatpush1.bf16.msra.mxu0 0
        %1126 = vmatprep.mubr.bf16.mxu0 0
        %1127 = vmatmul.mubr.bf16.gmra.mrb[0].mxu0 %v555
        %v1128 = vpop.f32.mrb[0].mxu0
        %v1129 = vadd.f32 %v1088, %v1128
        %v1130 = vpop.f32.mrb[0].mxu0
        %v1131 = vadd.f32 %v1090, %v1130
        %v1132 = vpop.f32.mrb[0].mxu0
        %v1133 = vpop.f32.mrb[0].mxu0
        %1134 = vdwg.mxu0
        %1135 = vmatprep.subr.bf16.mxu0 0
        %1136 = vmatpush1.bf16.msra.mxu0 %v911
        %1137 = vmatprep.subr.bf16.mxu0 0
        %1138 = vmatpush1.bf16.msra.mxu0 %v914
        %1139 = vmatprep.subr.bf16.mxu0 0
        %1140 = vmatpush1.bf16.msra.mxu0 %v917
        %1141 = vmatprep.subr.bf16.mxu0 0
        %1142 = vmatpush1.bf16.msra.mxu0 %v920
        %1143 = vmatprep.subr.bf16.mxu0 0
        %1144 = vmatpush1.bf16.msra.mxu0 %v923
        %1145 = vmatprep.subr.bf16.mxu0 0
        %1146 = vmatpush1.bf16.msra.mxu0 %v926
        %1147 = vmatprep.subr.bf16.mxu0 0
        %1148 = vmatpush1.bf16.msra.mxu0 %v929
        %1149 = vmatprep.subr.bf16.mxu0 0
        %1150 = vmatpush1.bf16.msra.mxu0 %v932
        %1151 = vmatprep.subr.bf16.mxu0 0
        %1152 = vmatpush1.bf16.msra.mxu0 %v935
        %1153 = vmatprep.subr.bf16.mxu0 0
        %1154 = vmatpush1.bf16.msra.mxu0 %v938
        %1155 = vmatprep.subr.bf16.mxu0 0
        %1156 = vmatpush1.bf16.msra.mxu0 %v941
        %1157 = vmatprep.subr.bf16.mxu0 0
        %1158 = vmatpush1.bf16.msra.mxu0 %v944
        %1159 = vmatprep.subr.bf16.mxu0 0
        %1160 = vmatpush1.bf16.msra.mxu0 %v947
        %1161 = vmatprep.subr.bf16.mxu0 0
        %1162 = vmatpush1.bf16.msra.mxu0 %v950
        %1163 = vmatprep.subr.bf16.mxu0 0
        %1164 = vmatpush1.bf16.msra.mxu0 %v953
        %1165 = vmatprep.subr.bf16.mxu0 0
        %1166 = vmatpush1.bf16.msra.mxu0 %v956
        %1167 = vmatprep.mubr.bf16.mxu0 %v554
        %1168 = vmatmul.mubr.bf16.gmra.mrb[0].mxu0 %v553
        %v1169 = vpop.f32.mrb[0].mxu0
        %v1170 = vadd.f32 %v665, %v1169
        %v1171 = vpop.f32.mrb[0].mxu0
        %v1172 = vpop.f32.mrb[0].mxu0
        %v1173 = vpop.f32.mrb[0].mxu0
        %1174 = vdwg.mxu0
        %1175 = vmatprep.subr.bf16.mxu0 0
        %1176 = vmatpush1.bf16.msra.mxu0 %v959
        %1177 = vmatprep.subr.bf16.mxu0 0
        %1178 = vmatpush1.bf16.msra.mxu0 %v962
        %1179 = vmatprep.subr.bf16.mxu0 0
        %1180 = vmatpush1.bf16.msra.mxu0 %v965
        %1181 = vmatprep.subr.bf16.mxu0 0
        %1182 = vmatpush1.bf16.msra.mxu0 %v968
        %1183 = vmatprep.subr.bf16.mxu0 0
        %1184 = vmatpush1.bf16.msra.mxu0 %v971
        %1185 = vmatprep.subr.bf16.mxu0 0
        %1186 = vmatpush1.bf16.msra.mxu0 %v974
        %1187 = vmatprep.subr.bf16.mxu0 0
        %1188 = vmatpush1.bf16.msra.mxu0 %v977
        %1189 = vmatprep.subr.bf16.mxu0 0
        %1190 = vmatpush1.bf16.msra.mxu0 %v980
        %1191 = vmatprep.subr.bf16.mxu0 0
        %1192 = vmatpush1.bf16.msra.mxu0 0
        %1193 = vmatprep.subr.bf16.mxu0 0
        %1194 = vmatpush1.bf16.msra.mxu0 0
        %1195 = vmatprep.subr.bf16.mxu0 0
        %1196 = vmatpush1.bf16.msra.mxu0 0
        %1197 = vmatprep.subr.bf16.mxu0 0
        %1198 = vmatpush1.bf16.msra.mxu0 0
        %1199 = vmatprep.subr.bf16.mxu0 0
        %1200 = vmatpush1.bf16.msra.mxu0 0
        %1201 = vmatprep.subr.bf16.mxu0 0
        %1202 = vmatpush1.bf16.msra.mxu0 0
        %1203 = vmatprep.subr.bf16.mxu0 0
        %1204 = vmatpush1.bf16.msra.mxu0 0
        %1205 = vmatprep.subr.bf16.mxu0 0
        %1206 = vmatpush1.bf16.msra.mxu0 0
        %1207 = vmatprep.mubr.bf16.mxu0 0
        %1208 = vmatmul.mubr.bf16.gmra.mrb[0].mxu0 %v555
        %v1209 = vpop.f32.mrb[0].mxu0
        %v1210 = vadd.f32 %v1170, %v1209
        %v1211 = vpop.f32.mrb[0].mxu0
        %v1212 = vpop.f32.mrb[0].mxu0
        %v1213 = vpop.f32.mrb[0].mxu0
        %1214 = vdwg.mxu0
        %v1215 = vpack.c.bf16 %v1129, %v1129
        %v1216 = vpack.c.bf16 %v1131, %v1131
        %v1217 = vpack.c.bf16 %v1210, %v1210
        %v1218 = vmax.bf16 %v1215, 0
        %v1219 = vmax.bf16 %v1216, 0
        %v1220 = vmax.bf16 %v1217, 0
        %v1221 = vld [vmem:[#allocation8] sm:$0xff]
        %v1222 = vld [vmem:[#allocation8 + $0x8] sm:$0xff]
        %v1223 = vld [vmem:[#allocation8 + $0x10] sm:$0xff]
        %v1224 = vld [vmem:[#allocation8 + $0x18] sm:$0xff]
        %v1225 = vld [vmem:[#allocation8 + $0x20] sm:$0xff]
        %v1226 = vld [vmem:[#allocation8 + $0x28] sm:$0xff]
        %v1227 = vld [vmem:[#allocation8 + $0x30] sm:$0xff]
        %v1228 = vld [vmem:[#allocation8 + $0x38] sm:$0xff]
        %v1229 = vld [vmem:[#allocation8 + $0x40] sm:$0xff]
        %v1230 = vld [vmem:[#allocation8 + $0x48] sm:$0xff]
        %v1231 = vld [vmem:[#allocation8 + $0x50] sm:$0xff]
        %v1232 = vld [vmem:[#allocation8 + $0x58] sm:$0xff]
        %v1233 = vld [vmem:[#allocation8 + $0x60] sm:$0xff]
        %v1234 = vld [vmem:[#allocation8 + $0x68] sm:$0xff]
        %v1235 = vld [vmem:[#allocation8 + $0x70] sm:$0xff]
        %v1236 = vld [vmem:[#allocation8 + $0x78] sm:$0xff]
        %v1237 = vld [vmem:[#allocation8 + $0x80] sm:$0xff]
        %v1238 = vld [vmem:[#allocation8 + $0x88] sm:$0xff]
        %v1239 = vld [vmem:[#allocation8 + $0x90] sm:$0xff]
        %v1240 = vld [vmem:[#allocation8 + $0x98] sm:$0xff]
        %v1241 = vld [vmem:[#allocation8 + $0xa0] sm:$0xff]
        %v1242 = vld [vmem:[#allocation8 + $0xa8] sm:$0xff]
        %v1243 = vld [vmem:[#allocation8 + $0xb0] sm:$0xff]
        %v1244 = vld [vmem:[#allocation8 + $0xb8] sm:$0xff]
        %v1245 = vld [vmem:[#allocation8 + $0xc0] sm:$0xff]
        %v1246 = vld [vmem:[#allocation8 + $0xc8] sm:$0xff]
        %v1247 = vld [vmem:[#allocation8 + $0xd0] sm:$0xff]
        %v1248 = vld [vmem:[#allocation8 + $0xd8] sm:$0xff]
        %v1249 = vld [vmem:[#allocation8 + $0xe0] sm:$0xff]
        %v1250 = vld [vmem:[#allocation8 + $0xe8] sm:$0xff]
        %v1251 = vld [vmem:[#allocation8 + $0xf0] sm:$0xff]
        %v1252 = vld [vmem:[#allocation8 + $0xf8] sm:$0xff]
        %v1253 = vld [vmem:[#allocation8 + $0x100] sm:$0xff]
        %v1254 = vld [vmem:[#allocation8 + $0x108] sm:$0xff]
        %v1255 = vld [vmem:[#allocation8 + $0x110] sm:$0xff]
        %v1256 = vld [vmem:[#allocation8 + $0x118] sm:$0xff]
        %v1257 = vld [vmem:[#allocation8 + $0x120] sm:$0xff]
        %v1258 = vld [vmem:[#allocation8 + $0x128] sm:$0xff]
        %v1259 = vld [vmem:[#allocation8 + $0x130] sm:$0xff]
        %v1260 = vld [vmem:[#allocation8 + $0x138] sm:$0xff]
        %v1261 = vld [vmem:[#allocation8 + $0x140] sm:$0xff]
        %v1262 = vld [vmem:[#allocation8 + $0x148] sm:$0xff]
        %v1263 = vld [vmem:[#allocation8 + $0x150] sm:$0xff]
        %v1264 = vld [vmem:[#allocation8 + $0x158] sm:$0xff]
        %v1265 = vld [vmem:[#allocation8 + $0x160] sm:$0xff]
        %v1266 = vld [vmem:[#allocation8 + $0x168] sm:$0xff]
        %v1267 = vld [vmem:[#allocation8 + $0x170] sm:$0xff]
        %v1268 = vld [vmem:[#allocation8 + $0x178] sm:$0xff]
        %v1269 = vld [vmem:[#allocation8 + $0x180] sm:$0xff]
        %v1270 = vld [vmem:[#allocation8 + $0x188] sm:$0xff]
        %v1271 = vld [vmem:[#allocation8 + $0x190] sm:$0xff]
        %v1272 = vld [vmem:[#allocation8 + $0x198] sm:$0xff]
        %v1273 = vld [vmem:[#allocation8 + $0x1a0] sm:$0xff]
        %v1274 = vld [vmem:[#allocation8 + $0x1a8] sm:$0xff]
        %v1275 = vld [vmem:[#allocation8 + $0x1b0] sm:$0xff]
        %v1276 = vld [vmem:[#allocation8 + $0x1b8] sm:$0xff]
        %v1277 = vld [vmem:[#allocation8 + $0x1c0] sm:$0xff]
        %v1278 = vld [vmem:[#allocation8 + $0x1c8] sm:$0xff]
        %v1279 = vld [vmem:[#allocation8 + $0x1d0] sm:$0xff]
        %v1280 = vld [vmem:[#allocation8 + $0x1d8] sm:$0xff]
        %v1281 = vld [vmem:[#allocation8 + $0x1e0] sm:$0xff]
        %v1282 = vld [vmem:[#allocation8 + $0x1e8] sm:$0xff]
        %v1283 = vld [vmem:[#allocation8 + $0x1f0] sm:$0xff]
        %v1284 = vld [vmem:[#allocation8 + $0x1f8] sm:$0xff]
        %v1285 = vld [vmem:[#allocation8 + $0x200] sm:$0xff]
        %v1286 = vld [vmem:[#allocation8 + $0x208] sm:$0xff]
        %v1287 = vld [vmem:[#allocation8 + $0x210] sm:$0xff]
        %v1288 = vld [vmem:[#allocation8 + $0x218] sm:$0xff]
        %v1289 = vld [vmem:[#allocation8 + $0x220] sm:$0xff]
        %v1290 = vld [vmem:[#allocation8 + $0x228] sm:$0xff]
        %v1291 = vld [vmem:[#allocation8 + $0x230] sm:$0xff]
        %v1292 = vld [vmem:[#allocation8 + $0x238] sm:$0xff]
        %v1293 = vld [vmem:[#allocation8 + $0x240] sm:$0xff]
        %v1294 = vld [vmem:[#allocation8 + $0x248] sm:$0xff]
        %v1295 = vld [vmem:[#allocation8 + $0x250] sm:$0xff]
        %v1296 = vld [vmem:[#allocation8 + $0x258] sm:$0xff]
        %v1297 = vld [vmem:[#allocation8 + $0x260] sm:$0xff]
        %v1298 = vld [vmem:[#allocation8 + $0x268] sm:$0xff]
        %v1299 = vld [vmem:[#allocation8 + $0x270] sm:$0xff]
        %v1300 = vld [vmem:[#allocation8 + $0x278] sm:$0xff]
        %v1301 = vld [vmem:[#allocation8 + $0x280] sm:$0xff]
        %v1302 = vld [vmem:[#allocation8 + $0x288] sm:$0xff]
        %v1303 = vld [vmem:[#allocation8 + $0x290] sm:$0xff]
        %v1304 = vld [vmem:[#allocation8 + $0x298] sm:$0xff]
        %v1305 = vld [vmem:[#allocation8 + $0x2a0] sm:$0xff]
        %v1306 = vld [vmem:[#allocation8 + $0x2a8] sm:$0xff]
        %v1307 = vld [vmem:[#allocation8 + $0x2b0] sm:$0xff]
        %v1308 = vld [vmem:[#allocation8 + $0x2b8] sm:$0xff]
        %v1309 = vld [vmem:[#allocation8 + $0x2c0] sm:$0xff]
        %v1310 = vld [vmem:[#allocation8 + $0x2c8] sm:$0xff]
        %v1311 = vld [vmem:[#allocation8 + $0x2d0] sm:$0xff]
        %v1312 = vld [vmem:[#allocation8 + $0x2d8] sm:$0xff]
        %v1313 = vld [vmem:[#allocation8 + $0x2e0] sm:$0xff]
        %v1314 = vld [vmem:[#allocation8 + $0x2e8] sm:$0xff]
        %v1315 = vld [vmem:[#allocation8 + $0x2f0] sm:$0xff]
        %v1316 = vld [vmem:[#allocation8 + $0x2f8] sm:$0xff]
        %v1317 = vld [vmem:[%s6] sm:$0xf]
        %v1319 = vlaneseq
        %v1320 = vshrl.u32 %v1319, 7
        %v1321 = vsub.s32 0, %v1320
        %v1322 = vrot.slane %v1317, %v1321
        %v1323 = vlaneseq
        %v1324 = vshrl.u32 %v1323, 7
        %v1325 = vsub.s32 1, %v1324
        %v1326 = vrot.slane %v1317, %v1325
        %v1327 = vlaneseq
        %v1328 = vshrl.u32 %v1327, 7
        %v1329 = vsub.s32 2, %v1328
        %v1330 = vrot.slane %v1317, %v1329
        %v1331 = vlaneseq
        %v1332 = vshrl.u32 %v1331, 7
        %v1333 = vsub.s32 3, %v1332
        %v1334 = vrot.slane %v1317, %v1333
        %v1435 = vunpack.c.l.b16 %v1221
        %v1436 = vunpack.c.h.b16 %v1221
        %v1437 = vunpack.c.l.b16 %v1222
        %v1438 = vunpack.c.h.b16 %v1222
        %v1439 = vunpack.c.l.b16 %v1223
        %v1440 = vunpack.c.h.b16 %v1223
        %v1441 = vunpack.c.l.b16 %v1224
        %v1442 = vunpack.c.h.b16 %v1224
        %v1443 = vunpack.c.l.b16 %v1225
        %v1444 = vunpack.c.h.b16 %v1225
        %v1445 = vunpack.c.l.b16 %v1226
        %v1446 = vunpack.c.h.b16 %v1226
        %v1447 = vunpack.c.l.b16 %v1227
        %v1448 = vunpack.c.h.b16 %v1227
        %v1449 = vunpack.c.l.b16 %v1228
        %v1450 = vunpack.c.h.b16 %v1228
        %v1451 = vunpack.c.l.b16 %v1229
        %v1452 = vunpack.c.h.b16 %v1229
        %v1453 = vunpack.c.l.b16 %v1230
        %v1454 = vunpack.c.h.b16 %v1230
        %v1455 = vunpack.c.l.b16 %v1231
        %v1456 = vunpack.c.h.b16 %v1231
        %v1457 = vunpack.c.l.b16 %v1232
        %v1458 = vunpack.c.h.b16 %v1232
        %v1459 = vunpack.c.l.b16 %v1233
        %v1460 = vunpack.c.h.b16 %v1233
        %v1461 = vunpack.c.l.b16 %v1234
        %v1462 = vunpack.c.h.b16 %v1234
        %v1463 = vunpack.c.l.b16 %v1235
        %v1464 = vunpack.c.h.b16 %v1235
        %v1465 = vunpack.c.l.b16 %v1236
        %v1466 = vunpack.c.h.b16 %v1236
        %v1467 = vunpack.c.l.b16 %v1237
        %v1468 = vunpack.c.h.b16 %v1237
        %v1469 = vunpack.c.l.b16 %v1238
        %v1470 = vunpack.c.h.b16 %v1238
        %v1471 = vunpack.c.l.b16 %v1239
        %v1472 = vunpack.c.h.b16 %v1239
        %v1473 = vunpack.c.l.b16 %v1240
        %v1474 = vunpack.c.h.b16 %v1240
        %v1475 = vunpack.c.l.b16 %v1241
        %v1476 = vunpack.c.h.b16 %v1241
        %v1477 = vunpack.c.l.b16 %v1242
        %v1478 = vunpack.c.h.b16 %v1242
        %v1479 = vunpack.c.l.b16 %v1243
        %v1480 = vunpack.c.h.b16 %v1243
        %v1481 = vunpack.c.l.b16 %v1244
        %v1482 = vunpack.c.h.b16 %v1244
        %v1483 = vunpack.c.l.b16 %v1245
        %v1484 = vunpack.c.h.b16 %v1245
        %v1485 = vunpack.c.l.b16 %v1246
        %v1486 = vunpack.c.h.b16 %v1246
        %v1487 = vunpack.c.l.b16 %v1247
        %v1488 = vunpack.c.h.b16 %v1247
        %v1489 = vunpack.c.l.b16 %v1248
        %v1490 = vunpack.c.h.b16 %v1248
        %v1491 = vunpack.c.l.b16 %v1249
        %v1492 = vunpack.c.h.b16 %v1249
        %v1493 = vunpack.c.l.b16 %v1250
        %v1494 = vunpack.c.h.b16 %v1250
        %v1495 = vunpack.c.l.b16 %v1251
        %v1496 = vunpack.c.h.b16 %v1251
        %v1497 = vunpack.c.l.b16 %v1252
        %v1498 = vunpack.c.h.b16 %v1252
        %v1499 = vunpack.c.l.b16 %v1253
        %v1500 = vunpack.c.h.b16 %v1253
        %v1501 = vunpack.c.l.b16 %v1254
        %v1502 = vunpack.c.h.b16 %v1254
        %v1503 = vunpack.c.l.b16 %v1255
        %v1504 = vunpack.c.h.b16 %v1255
        %v1505 = vunpack.c.l.b16 %v1256
        %v1506 = vunpack.c.h.b16 %v1256
        %v1507 = vunpack.c.l.b16 %v1257
        %v1508 = vunpack.c.h.b16 %v1257
        %v1509 = vunpack.c.l.b16 %v1258
        %v1510 = vunpack.c.h.b16 %v1258
        %v1511 = vunpack.c.l.b16 %v1259
        %v1512 = vunpack.c.h.b16 %v1259
        %v1513 = vunpack.c.l.b16 %v1260
        %v1514 = vunpack.c.h.b16 %v1260
        %v1515 = vunpack.c.l.b16 %v1261
        %v1516 = vunpack.c.h.b16 %v1261
        %v1517 = vunpack.c.l.b16 %v1262
        %v1518 = vunpack.c.h.b16 %v1262
        %v1519 = vunpack.c.l.b16 %v1263
        %v1520 = vunpack.c.h.b16 %v1263
        %v1521 = vunpack.c.l.b16 %v1264
        %v1522 = vunpack.c.h.b16 %v1264
        %v1523 = vunpack.c.l.b16 %v1265
        %v1524 = vunpack.c.h.b16 %v1265
        %v1525 = vunpack.c.l.b16 %v1266
        %v1526 = vunpack.c.h.b16 %v1266
        %v1527 = vunpack.c.l.b16 %v1267
        %v1528 = vunpack.c.h.b16 %v1267
        %v1529 = vunpack.c.l.b16 %v1268
        %v1530 = vunpack.c.h.b16 %v1268
        %v1531 = vunpack.c.l.b16 %v1269
        %v1532 = vunpack.c.h.b16 %v1269
        %v1533 = vunpack.c.l.b16 %v1270
        %v1534 = vunpack.c.h.b16 %v1270
        %v1535 = vunpack.c.l.b16 %v1271
        %v1536 = vunpack.c.h.b16 %v1271
        %v1537 = vunpack.c.l.b16 %v1272
        %v1538 = vunpack.c.h.b16 %v1272
        %v1539 = vunpack.c.l.b16 %v1273
        %v1540 = vunpack.c.h.b16 %v1273
        %v1541 = vunpack.c.l.b16 %v1274
        %v1542 = vunpack.c.h.b16 %v1274
        %v1543 = vunpack.c.l.b16 %v1275
        %v1544 = vunpack.c.h.b16 %v1275
        %v1545 = vunpack.c.l.b16 %v1276
        %v1546 = vunpack.c.h.b16 %v1276
        %v1547 = vunpack.c.l.b16 %v1277
        %v1548 = vunpack.c.h.b16 %v1277
        %v1549 = vunpack.c.l.b16 %v1278
        %v1550 = vunpack.c.h.b16 %v1278
        %v1551 = vunpack.c.l.b16 %v1279
        %v1552 = vunpack.c.h.b16 %v1279
        %v1553 = vunpack.c.l.b16 %v1280
        %v1554 = vunpack.c.h.b16 %v1280
        %v1555 = vunpack.c.l.b16 %v1281
        %v1556 = vunpack.c.h.b16 %v1281
        %v1557 = vunpack.c.l.b16 %v1282
        %v1558 = vunpack.c.h.b16 %v1282
        %v1559 = vunpack.c.l.b16 %v1283
        %v1560 = vunpack.c.h.b16 %v1283
        %v1561 = vunpack.c.l.b16 %v1284
        %v1562 = vunpack.c.h.b16 %v1284
        %v1563 = vunpack.c.l.b16 %v1285
        %v1564 = vunpack.c.h.b16 %v1285
        %v1565 = vunpack.c.l.b16 %v1286
        %v1566 = vunpack.c.h.b16 %v1286
        %v1567 = vunpack.c.l.b16 %v1287
        %v1568 = vunpack.c.h.b16 %v1287
        %v1569 = vunpack.c.l.b16 %v1288
        %v1570 = vunpack.c.h.b16 %v1288
        %v1571 = vunpack.c.l.b16 %v1289
        %v1572 = vunpack.c.h.b16 %v1289
        %v1573 = vunpack.c.l.b16 %v1290
        %v1574 = vunpack.c.h.b16 %v1290
        %v1575 = vunpack.c.l.b16 %v1291
        %v1576 = vunpack.c.h.b16 %v1291
        %v1577 = vunpack.c.l.b16 %v1292
        %v1578 = vunpack.c.h.b16 %v1292
        %v1579 = vunpack.c.l.b16 %v1293
        %v1580 = vunpack.c.h.b16 %v1293
        %v1581 = vunpack.c.l.b16 %v1294
        %v1582 = vunpack.c.h.b16 %v1294
        %v1583 = vunpack.c.l.b16 %v1295
        %v1584 = vunpack.c.h.b16 %v1295
        %v1585 = vunpack.c.l.b16 %v1296
        %v1586 = vunpack.c.h.b16 %v1296
        %v1587 = vunpack.c.l.b16 %v1297
        %v1588 = vunpack.c.h.b16 %v1297
        %v1589 = vunpack.c.l.b16 %v1298
        %v1590 = vunpack.c.h.b16 %v1298
        %v1591 = vunpack.c.l.b16 %v1299
        %v1592 = vunpack.c.h.b16 %v1299
        %v1593 = vunpack.c.l.b16 %v1300
        %v1594 = vunpack.c.h.b16 %v1300
        %v1595 = vunpack.c.l.b16 %v1301
        %v1596 = vunpack.c.h.b16 %v1301
        %v1597 = vunpack.c.l.b16 %v1302
        %v1598 = vunpack.c.h.b16 %v1302
        %v1599 = vunpack.c.l.b16 %v1303
        %v1600 = vunpack.c.h.b16 %v1303
        %v1601 = vunpack.c.l.b16 %v1304
        %v1602 = vunpack.c.h.b16 %v1304
        %v1603 = vunpack.c.l.b16 %v1305
        %v1604 = vunpack.c.h.b16 %v1305
        %v1605 = vunpack.c.l.b16 %v1306
        %v1606 = vunpack.c.h.b16 %v1306
        %v1607 = vunpack.c.l.b16 %v1307
        %v1608 = vunpack.c.h.b16 %v1307
        %v1609 = vunpack.c.l.b16 %v1308
        %v1610 = vunpack.c.h.b16 %v1308
        %v1611 = vunpack.c.l.b16 %v1309
        %v1612 = vunpack.c.h.b16 %v1309
        %v1613 = vunpack.c.l.b16 %v1310
        %v1614 = vunpack.c.h.b16 %v1310
        %v1615 = vunpack.c.l.b16 %v1311
        %v1616 = vunpack.c.h.b16 %v1311
        %v1617 = vunpack.c.l.b16 %v1312
        %v1618 = vunpack.c.h.b16 %v1312
        %v1619 = vunpack.c.l.b16 %v1313
        %v1620 = vunpack.c.h.b16 %v1313
        %v1621 = vunpack.c.l.b16 %v1314
        %v1622 = vunpack.c.h.b16 %v1314
        %v1623 = vunpack.c.l.b16 %v1315
        %v1624 = vunpack.c.h.b16 %v1315
        %v1625 = vunpack.c.l.b16 %v1316
        %v1626 = vunpack.c.h.b16 %v1316
        %v1627 = vpack.c.b16 %v1439, %v1435
        %v1628 = vpack.c.b16 %v1440, %v1436
        %v1629 = vpack.c.b16 %v1441, %v1437
        %v1630 = vpack.c.b16 %v1442, %v1438
        %v1631 = vpack.c.b16 %v1447, %v1443
        %v1632 = vpack.c.b16 %v1448, %v1444
        %v1633 = vpack.c.b16 %v1449, %v1445
        %v1634 = vpack.c.b16 %v1450, %v1446
        %v1635 = vpack.c.b16 %v1455, %v1451
        %v1636 = vpack.c.b16 %v1456, %v1452
        %v1637 = vpack.c.b16 %v1457, %v1453
        %v1638 = vpack.c.b16 %v1458, %v1454
        %v1639 = vpack.c.b16 %v1463, %v1459
        %v1640 = vpack.c.b16 %v1464, %v1460
        %v1641 = vpack.c.b16 %v1465, %v1461
        %v1642 = vpack.c.b16 %v1466, %v1462
        %v1643 = vpack.c.b16 %v1471, %v1467
        %v1644 = vpack.c.b16 %v1472, %v1468
        %v1645 = vpack.c.b16 %v1473, %v1469
        %v1646 = vpack.c.b16 %v1474, %v1470
        %v1647 = vpack.c.b16 %v1479, %v1475
        %v1648 = vpack.c.b16 %v1480, %v1476
        %v1649 = vpack.c.b16 %v1481, %v1477
        %v1650 = vpack.c.b16 %v1482, %v1478
        %v1651 = vpack.c.b16 %v1487, %v1483
        %v1652 = vpack.c.b16 %v1488, %v1484
        %v1653 = vpack.c.b16 %v1489, %v1485
        %v1654 = vpack.c.b16 %v1490, %v1486
        %v1655 = vpack.c.b16 %v1495, %v1491
        %v1656 = vpack.c.b16 %v1496, %v1492
        %v1657 = vpack.c.b16 %v1497, %v1493
        %v1658 = vpack.c.b16 %v1498, %v1494
        %v1659 = vpack.c.b16 %v1503, %v1499
        %v1660 = vpack.c.b16 %v1504, %v1500
        %v1661 = vpack.c.b16 %v1505, %v1501
        %v1662 = vpack.c.b16 %v1506, %v1502
        %v1663 = vpack.c.b16 %v1511, %v1507
        %v1664 = vpack.c.b16 %v1512, %v1508
        %v1665 = vpack.c.b16 %v1513, %v1509
        %v1666 = vpack.c.b16 %v1514, %v1510
        %v1667 = vpack.c.b16 %v1519, %v1515
        %v1668 = vpack.c.b16 %v1520, %v1516
        %v1669 = vpack.c.b16 %v1521, %v1517
        %v1670 = vpack.c.b16 %v1522, %v1518
        %v1671 = vpack.c.b16 %v1527, %v1523
        %v1672 = vpack.c.b16 %v1528, %v1524
        %v1673 = vpack.c.b16 %v1529, %v1525
        %v1674 = vpack.c.b16 %v1530, %v1526
        %v1675 = vpack.c.b16 %v1535, %v1531
        %v1676 = vpack.c.b16 %v1536, %v1532
        %v1677 = vpack.c.b16 %v1537, %v1533
        %v1678 = vpack.c.b16 %v1538, %v1534
        %v1679 = vpack.c.b16 %v1543, %v1539
        %v1680 = vpack.c.b16 %v1544, %v1540
        %v1681 = vpack.c.b16 %v1545, %v1541
        %v1682 = vpack.c.b16 %v1546, %v1542
        %v1683 = vpack.c.b16 %v1551, %v1547
        %v1684 = vpack.c.b16 %v1552, %v1548
        %v1685 = vpack.c.b16 %v1553, %v1549
        %v1686 = vpack.c.b16 %v1554, %v1550
        %v1687 = vpack.c.b16 %v1559, %v1555
        %v1688 = vpack.c.b16 %v1560, %v1556
        %v1689 = vpack.c.b16 %v1561, %v1557
        %v1690 = vpack.c.b16 %v1562, %v1558
        %v1691 = vpack.c.b16 %v1567, %v1563
        %v1692 = vpack.c.b16 %v1568, %v1564
        %v1693 = vpack.c.b16 %v1569, %v1565
        %v1694 = vpack.c.b16 %v1570, %v1566
        %v1695 = vpack.c.b16 %v1575, %v1571
        %v1696 = vpack.c.b16 %v1576, %v1572
        %v1697 = vpack.c.b16 %v1577, %v1573
        %v1698 = vpack.c.b16 %v1578, %v1574
        %v1699 = vpack.c.b16 %v1583, %v1579
        %v1700 = vpack.c.b16 %v1584, %v1580
        %v1701 = vpack.c.b16 %v1585, %v1581
        %v1702 = vpack.c.b16 %v1586, %v1582
        %v1703 = vpack.c.b16 %v1591, %v1587
        %v1704 = vpack.c.b16 %v1592, %v1588
        %v1705 = vpack.c.b16 %v1593, %v1589
        %v1706 = vpack.c.b16 %v1594, %v1590
        %v1707 = vpack.c.b16 %v1599, %v1595
        %v1708 = vpack.c.b16 %v1600, %v1596
        %v1709 = vpack.c.b16 %v1601, %v1597
        %v1710 = vpack.c.b16 %v1602, %v1598
        %v1711 = vpack.c.b16 %v1607, %v1603
        %v1712 = vpack.c.b16 %v1608, %v1604
        %v1713 = vpack.c.b16 %v1609, %v1605
        %v1714 = vpack.c.b16 %v1610, %v1606
        %v1715 = vpack.c.b16 %v1615, %v1611
        %v1716 = vpack.c.b16 %v1616, %v1612
        %v1717 = vpack.c.b16 %v1617, %v1613
        %v1718 = vpack.c.b16 %v1618, %v1614
        %v1719 = vpack.c.b16 %v1623, %v1619
        %v1720 = vpack.c.b16 %v1624, %v1620
        %v1721 = vpack.c.b16 %v1625, %v1621
        %v1722 = vpack.c.b16 %v1626, %v1622
        %1819 = vmatprep.subr.bf16.mxu0 %v1628
        %1820 = vmatpush1.bf16.msra.mxu0 %v1627
        %1821 = vmatprep.subr.bf16.mxu0 %v1632
        %1822 = vmatpush1.bf16.msra.mxu0 %v1631
        %1823 = vmatprep.subr.bf16.mxu0 %v1636
        %1824 = vmatpush1.bf16.msra.mxu0 %v1635
        %1825 = vmatprep.subr.bf16.mxu0 %v1640
        %1826 = vmatpush1.bf16.msra.mxu0 %v1639
        %1827 = vmatprep.subr.bf16.mxu0 %v1644
        %1828 = vmatpush1.bf16.msra.mxu0 %v1643
        %1829 = vmatprep.subr.bf16.mxu0 %v1648
        %1830 = vmatpush1.bf16.msra.mxu0 %v1647
        %1831 = vmatprep.subr.bf16.mxu0 %v1652
        %1832 = vmatpush1.bf16.msra.mxu0 %v1651
        %1833 = vmatprep.subr.bf16.mxu0 %v1656
        %1834 = vmatpush1.bf16.msra.mxu0 %v1655
        %1835 = vmatprep.subr.bf16.mxu0 %v1660
        %1836 = vmatpush1.bf16.msra.mxu0 %v1659
        %1837 = vmatprep.subr.bf16.mxu0 %v1664
        %1838 = vmatpush1.bf16.msra.mxu0 %v1663
        %1839 = vmatprep.subr.bf16.mxu0 %v1668
        %1840 = vmatpush1.bf16.msra.mxu0 %v1667
        %1841 = vmatprep.subr.bf16.mxu0 %v1672
        %1842 = vmatpush1.bf16.msra.mxu0 %v1671
        %1843 = vmatprep.subr.bf16.mxu0 %v1676
        %1844 = vmatpush1.bf16.msra.mxu0 %v1675
        %1845 = vmatprep.subr.bf16.mxu0 %v1680
        %1846 = vmatpush1.bf16.msra.mxu0 %v1679
        %1847 = vmatprep.subr.bf16.mxu0 %v1684
        %1848 = vmatpush1.bf16.msra.mxu0 %v1683
        %1849 = vmatprep.subr.bf16.mxu0 %v1688
        %1850 = vmatpush1.bf16.msra.mxu0 %v1687
        %1851 = vmatprep.mubr.bf16.mxu0 %v1219
        %1852 = vmatmul.mubr.bf16.gmra.mrb[0].mxu0 %v1218
        %v1853 = vpop.f32.mrb[0].mxu0
        %v1854 = vadd.f32 %v1322, %v1853
        %v1855 = vpop.f32.mrb[0].mxu0
        %v1856 = vadd.f32 %v1326, %v1855
        %v1857 = vpop.f32.mrb[0].mxu0
        %v1858 = vpop.f32.mrb[0].mxu0
        %1859 = vdwg.mxu0
        %1860 = vmatprep.subr.bf16.mxu0 %v1692
        %1861 = vmatpush1.bf16.msra.mxu0 %v1691
        %1862 = vmatprep.subr.bf16.mxu0 %v1696
        %1863 = vmatpush1.bf16.msra.mxu0 %v1695
        %1864 = vmatprep.subr.bf16.mxu0 %v1700
        %1865 = vmatpush1.bf16.msra.mxu0 %v1699
        %1866 = vmatprep.subr.bf16.mxu0 %v1704
        %1867 = vmatpush1.bf16.msra.mxu0 %v1703
        %1868 = vmatprep.subr.bf16.mxu0 %v1708
        %1869 = vmatpush1.bf16.msra.mxu0 %v1707
        %1870 = vmatprep.subr.bf16.mxu0 %v1712
        %1871 = vmatpush1.bf16.msra.mxu0 %v1711
        %1872 = vmatprep.subr.bf16.mxu0 %v1716
        %1873 = vmatpush1.bf16.msra.mxu0 %v1715
        %1874 = vmatprep.subr.bf16.mxu0 %v1720
        %1875 = vmatpush1.bf16.msra.mxu0 %v1719
        %1876 = vmatprep.subr.bf16.mxu0 0
        %1877 = vmatpush1.bf16.msra.mxu0 0
        %1878 = vmatprep.subr.bf16.mxu0 0
        %1879 = vmatpush1.bf16.msra.mxu0 0
        %1880 = vmatprep.subr.bf16.mxu0 0
        %1881 = vmatpush1.bf16.msra.mxu0 0
        %1882 = vmatprep.subr.bf16.mxu0 0
        %1883 = vmatpush1.bf16.msra.mxu0 0
        %1884 = vmatprep.subr.bf16.mxu0 0
        %1885 = vmatpush1.bf16.msra.mxu0 0
        %1886 = vmatprep.subr.bf16.mxu0 0
        %1887 = vmatpush1.bf16.msra.mxu0 0
        %1888 = vmatprep.subr.bf16.mxu0 0
        %1889 = vmatpush1.bf16.msra.mxu0 0
        %1890 = vmatprep.subr.bf16.mxu0 0
        %1891 = vmatpush1.bf16.msra.mxu0 0
        %1892 = vmatprep.mubr.bf16.mxu0 0
        %1893 = vmatmul.mubr.bf16.gmra.mrb[0].mxu0 %v1220
        %v1894 = vpop.f32.mrb[0].mxu0
        %v1895 = vadd.f32 %v1854, %v1894
        %v1896 = vpop.f32.mrb[0].mxu0
        %v1897 = vadd.f32 %v1856, %v1896
        %v1898 = vpop.f32.mrb[0].mxu0
        %v1899 = vpop.f32.mrb[0].mxu0
        %1900 = vdwg.mxu0
        %1901 = vmatprep.subr.bf16.mxu0 %v1630
        %1902 = vmatpush1.bf16.msra.mxu0 %v1629
        %1903 = vmatprep.subr.bf16.mxu0 %v1634
        %1904 = vmatpush1.bf16.msra.mxu0 %v1633
        %1905 = vmatprep.subr.bf16.mxu0 %v1638
        %1906 = vmatpush1.bf16.msra.mxu0 %v1637
        %1907 = vmatprep.subr.bf16.mxu0 %v1642
        %1908 = vmatpush1.bf16.msra.mxu0 %v1641
        %1909 = vmatprep.subr.bf16.mxu0 %v1646
        %1910 = vmatpush1.bf16.msra.mxu0 %v1645
        %1911 = vmatprep.subr.bf16.mxu0 %v1650
        %1912 = vmatpush1.bf16.msra.mxu0 %v1649
        %1913 = vmatprep.subr.bf16.mxu0 %v1654
        %1914 = vmatpush1.bf16.msra.mxu0 %v1653
        %1915 = vmatprep.subr.bf16.mxu0 %v1658
        %1916 = vmatpush1.bf16.msra.mxu0 %v1657
        %1917 = vmatprep.subr.bf16.mxu0 %v1662
        %1918 = vmatpush1.bf16.msra.mxu0 %v1661
        %1919 = vmatprep.subr.bf16.mxu0 %v1666
        %1920 = vmatpush1.bf16.msra.mxu0 %v1665
        %1921 = vmatprep.subr.bf16.mxu0 %v1670
        %1922 = vmatpush1.bf16.msra.mxu0 %v1669
        %1923 = vmatprep.subr.bf16.mxu0 %v1674
        %1924 = vmatpush1.bf16.msra.mxu0 %v1673
        %1925 = vmatprep.subr.bf16.mxu0 %v1678
        %1926 = vmatpush1.bf16.msra.mxu0 %v1677
        %1927 = vmatprep.subr.bf16.mxu0 %v1682
        %1928 = vmatpush1.bf16.msra.mxu0 %v1681
        %1929 = vmatprep.subr.bf16.mxu0 %v1686
        %1930 = vmatpush1.bf16.msra.mxu0 %v1685
        %1931 = vmatprep.subr.bf16.mxu0 %v1690
        %1932 = vmatpush1.bf16.msra.mxu0 %v1689
        %1933 = vmatprep.mubr.bf16.mxu0 %v1219
        %1934 = vmatmul.mubr.bf16.gmra.mrb[0].mxu0 %v1218
        %v1935 = vpop.f32.mrb[0].mxu0
        %v1936 = vadd.f32 %v1330, %v1935
        %v1937 = vpop.f32.mrb[0].mxu0
        %v1938 = vadd.f32 %v1334, %v1937
        %v1939 = vpop.f32.mrb[0].mxu0
        %v1940 = vpop.f32.mrb[0].mxu0
        %1941 = vdwg.mxu0
        %1942 = vmatprep.subr.bf16.mxu0 %v1694
        %1943 = vmatpush1.bf16.msra.mxu0 %v1693
        %1944 = vmatprep.subr.bf16.mxu0 %v1698
        %1945 = vmatpush1.bf16.msra.mxu0 %v1697
        %1946 = vmatprep.subr.bf16.mxu0 %v1702
        %1947 = vmatpush1.bf16.msra.mxu0 %v1701
        %1948 = vmatprep.subr.bf16.mxu0 %v1706
        %1949 = vmatpush1.bf16.msra.mxu0 %v1705
        %1950 = vmatprep.subr.bf16.mxu0 %v1710
        %1951 = vmatpush1.bf16.msra.mxu0 %v1709
        %1952 = vmatprep.subr.bf16.mxu0 %v1714
        %1953 = vmatpush1.bf16.msra.mxu0 %v1713
        %1954 = vmatprep.subr.bf16.mxu0 %v1718
        %1955 = vmatpush1.bf16.msra.mxu0 %v1717
        %1956 = vmatprep.subr.bf16.mxu0 %v1722
        %1957 = vmatpush1.bf16.msra.mxu0 %v1721
        %1958 = vmatprep.subr.bf16.mxu0 0
        %1959 = vmatpush1.bf16.msra.mxu0 0
        %1960 = vmatprep.subr.bf16.mxu0 0
        %1961 = vmatpush1.bf16.msra.mxu0 0
        %1962 = vmatprep.subr.bf16.mxu0 0
        %1963 = vmatpush1.bf16.msra.mxu0 0
        %1964 = vmatprep.subr.bf16.mxu0 0
        %1965 = vmatpush1.bf16.msra.mxu0 0
        %1966 = vmatprep.subr.bf16.mxu0 0
        %1967 = vmatpush1.bf16.msra.mxu0 0
        %1968 = vmatprep.subr.bf16.mxu0 0
        %1969 = vmatpush1.bf16.msra.mxu0 0
        %1970 = vmatprep.subr.bf16.mxu0 0
        %1971 = vmatpush1.bf16.msra.mxu0 0
        %1972 = vmatprep.subr.bf16.mxu0 0
        %1973 = vmatpush1.bf16.msra.mxu0 0
        %1974 = vmatprep.mubr.bf16.mxu0 0
        %1975 = vmatmul.mubr.bf16.gmra.mrb[0].mxu0 %v1220
        %v1976 = vpop.f32.mrb[0].mxu0
        %v1977 = vadd.f32 %v1936, %v1976
        %v1978 = vpop.f32.mrb[0].mxu0
        %v1979 = vadd.f32 %v1938, %v1978
        %v1980 = vpop.f32.mrb[0].mxu0
        %v1981 = vpop.f32.mrb[0].mxu0
        %1982 = vdwg.mxu0
        %v1983 = vpack.c.bf16 %v1895, %v1895
        %v1984 = vpack.c.bf16 %v1897, %v1897
        %v1985 = vpack.c.bf16 %v1977, %v1977
        %v1986 = vpack.c.bf16 %v1979, %v1979
        %v1987 = vmax.bf16 %v1983, 0
        %v1988 = vmax.bf16 %v1984, 0
        %v1989 = vmax.bf16 %v1985, 0
        %v1990 = vmax.bf16 %v1986, 0
        %v1991 = vld [vmem:[#allocation10] sm:$0xf]
        %v1992 = vld [vmem:[#allocation10 + $0x4] sm:$0xf]
        %v1993 = vld [vmem:[#allocation10 + $0x8] sm:$0xf]
        %v1994 = vld [vmem:[#allocation10 + $0xc] sm:$0xf]
        %v1995 = vld [vmem:[#allocation10 + $0x10] sm:$0xf]
        %v1996 = vld [vmem:[#allocation10 + $0x14] sm:$0xf]
        %v1997 = vld [vmem:[#allocation10 + $0x18] sm:$0xf]
        %v1998 = vld [vmem:[#allocation10 + $0x1c] sm:$0xf]
        %v1999 = vld [vmem:[#allocation10 + $0x20] sm:$0xf]
        %v2000 = vld [vmem:[#allocation10 + $0x24] sm:$0xf]
        %v2001 = vld [vmem:[#allocation10 + $0x28] sm:$0xf]
        %v2002 = vld [vmem:[#allocation10 + $0x2c] sm:$0xf]
        %v2003 = vld [vmem:[#allocation10 + $0x30] sm:$0xf]
        %v2004 = vld [vmem:[#allocation10 + $0x34] sm:$0xf]
        %v2005 = vld [vmem:[#allocation10 + $0x38] sm:$0xf]
        %v2006 = vld [vmem:[#allocation10 + $0x3c] sm:$0xf]
        %v2007 = vld [vmem:[#allocation10 + $0x40] sm:$0xf]
        %v2008 = vld [vmem:[#allocation10 + $0x44] sm:$0xf]
        %v2009 = vld [vmem:[#allocation10 + $0x48] sm:$0xf]
        %v2010 = vld [vmem:[#allocation10 + $0x4c] sm:$0xf]
        %v2011 = vld [vmem:[#allocation10 + $0x50] sm:$0xf]
        %v2012 = vld [vmem:[#allocation10 + $0x54] sm:$0xf]
        %v2013 = vld [vmem:[#allocation10 + $0x58] sm:$0xf]
        %v2014 = vld [vmem:[#allocation10 + $0x5c] sm:$0xf]
        %v2015 = vld [vmem:[#allocation10 + $0x60] sm:$0xf]
        %v2016 = vld [vmem:[#allocation10 + $0x64] sm:$0xf]
        %v2017 = vld [vmem:[#allocation10 + $0x68] sm:$0xf]
        %v2018 = vld [vmem:[#allocation10 + $0x6c] sm:$0xf]
        %v2019 = vld [vmem:[#allocation10 + $0x70] sm:$0xf]
        %v2020 = vld [vmem:[#allocation10 + $0x74] sm:$0xf]
        %v2021 = vld [vmem:[#allocation10 + $0x78] sm:$0xf]
        %v2022 = vld [vmem:[#allocation10 + $0x7c] sm:$0xf]
        %v2023 = vld [vmem:[#allocation10 + $0x80] sm:$0xf]
        %v2024 = vld [vmem:[#allocation10 + $0x84] sm:$0xf]
        %v2025 = vld [vmem:[#allocation10 + $0x88] sm:$0xf]
        %v2026 = vld [vmem:[#allocation10 + $0x8c] sm:$0xf]
        %v2027 = vld [vmem:[#allocation10 + $0x90] sm:$0xf]
        %v2028 = vld [vmem:[#allocation10 + $0x94] sm:$0xf]
        %v2029 = vld [vmem:[#allocation10 + $0x98] sm:$0xf]
        %v2030 = vld [vmem:[#allocation10 + $0x9c] sm:$0xf]
        %v2031 = vld [vmem:[#allocation10 + $0xa0] sm:$0xf]
        %v2032 = vld [vmem:[#allocation10 + $0xa4] sm:$0xf]
        %v2033 = vld [vmem:[#allocation10 + $0xa8] sm:$0xf]
        %v2034 = vld [vmem:[#allocation10 + $0xac] sm:$0xf]
        %v2035 = vld [vmem:[#allocation10 + $0xb0] sm:$0xf]
        %v2036 = vld [vmem:[#allocation10 + $0xb4] sm:$0xf]
        %v2037 = vld [vmem:[#allocation10 + $0xb8] sm:$0xf]
        %v2038 = vld [vmem:[#allocation10 + $0xbc] sm:$0xf]
        %v2039 = vld [vmem:[#allocation10 + $0xc0] sm:$0xf]
        %v2040 = vld [vmem:[#allocation10 + $0xc4] sm:$0xf]
        %v2041 = vld [vmem:[#allocation10 + $0xc8] sm:$0xf]
        %v2042 = vld [vmem:[#allocation10 + $0xcc] sm:$0xf]
        %v2043 = vld [vmem:[#allocation10 + $0xd0] sm:$0xf]
        %v2044 = vld [vmem:[#allocation10 + $0xd4] sm:$0xf]
        %v2045 = vld [vmem:[#allocation10 + $0xd8] sm:$0xf]
        %v2046 = vld [vmem:[#allocation10 + $0xdc] sm:$0xf]
        %v2047 = vld [vmem:[#allocation10 + $0xe0] sm:$0xf]
        %v2048 = vld [vmem:[#allocation10 + $0xe4] sm:$0xf]
        %v2049 = vld [vmem:[#allocation10 + $0xe8] sm:$0xf]
        %v2050 = vld [vmem:[#allocation10 + $0xec] sm:$0xf]
        %v2051 = vld [vmem:[#allocation10 + $0xf0] sm:$0xf]
        %v2052 = vld [vmem:[#allocation10 + $0xf4] sm:$0xf]
        %v2053 = vld [vmem:[#allocation10 + $0xf8] sm:$0xf]
        %v2054 = vld [vmem:[#allocation10 + $0xfc] sm:$0xf]
        %v2055 = vld [vmem:[%s8] sm:$0x1]
        %v2057 = vlaneseq
        %v2058 = vshrl.u32 %v2057, 7
        %v2059 = vsub.s32 0, %v2058
        %v2060 = vrot.slane %v2055, %v2059
        %v2126 = vunpack.c.l.b16 %v1991
        %v2127 = vunpack.c.l.b16 %v1992
        %v2128 = vunpack.c.l.b16 %v1993
        %v2129 = vunpack.c.l.b16 %v1994
        %v2130 = vunpack.c.l.b16 %v1995
        %v2131 = vunpack.c.l.b16 %v1996
        %v2132 = vunpack.c.l.b16 %v1997
        %v2133 = vunpack.c.l.b16 %v1998
        %v2134 = vunpack.c.l.b16 %v1999
        %v2135 = vunpack.c.l.b16 %v2000
        %v2136 = vunpack.c.l.b16 %v2001
        %v2137 = vunpack.c.l.b16 %v2002
        %v2138 = vunpack.c.l.b16 %v2003
        %v2139 = vunpack.c.l.b16 %v2004
        %v2140 = vunpack.c.l.b16 %v2005
        %v2141 = vunpack.c.l.b16 %v2006
        %v2142 = vunpack.c.l.b16 %v2007
        %v2143 = vunpack.c.l.b16 %v2008
        %v2144 = vunpack.c.l.b16 %v2009
        %v2145 = vunpack.c.l.b16 %v2010
        %v2146 = vunpack.c.l.b16 %v2011
        %v2147 = vunpack.c.l.b16 %v2012
        %v2148 = vunpack.c.l.b16 %v2013
        %v2149 = vunpack.c.l.b16 %v2014
        %v2150 = vunpack.c.l.b16 %v2015
        %v2151 = vunpack.c.l.b16 %v2016
        %v2152 = vunpack.c.l.b16 %v2017
        %v2153 = vunpack.c.l.b16 %v2018
        %v2154 = vunpack.c.l.b16 %v2019
        %v2155 = vunpack.c.l.b16 %v2020
        %v2156 = vunpack.c.l.b16 %v2021
        %v2157 = vunpack.c.l.b16 %v2022
        %v2158 = vunpack.c.l.b16 %v2023
        %v2159 = vunpack.c.l.b16 %v2024
        %v2160 = vunpack.c.l.b16 %v2025
        %v2161 = vunpack.c.l.b16 %v2026
        %v2162 = vunpack.c.l.b16 %v2027
        %v2163 = vunpack.c.l.b16 %v2028
        %v2164 = vunpack.c.l.b16 %v2029
        %v2165 = vunpack.c.l.b16 %v2030
        %v2166 = vunpack.c.l.b16 %v2031
        %v2167 = vunpack.c.l.b16 %v2032
        %v2168 = vunpack.c.l.b16 %v2033
        %v2169 = vunpack.c.l.b16 %v2034
        %v2170 = vunpack.c.l.b16 %v2035
        %v2171 = vunpack.c.l.b16 %v2036
        %v2172 = vunpack.c.l.b16 %v2037
        %v2173 = vunpack.c.l.b16 %v2038
        %v2174 = vunpack.c.l.b16 %v2039
        %v2175 = vunpack.c.l.b16 %v2040
        %v2176 = vunpack.c.l.b16 %v2041
        %v2177 = vunpack.c.l.b16 %v2042
        %v2178 = vunpack.c.l.b16 %v2043
        %v2179 = vunpack.c.l.b16 %v2044
        %v2180 = vunpack.c.l.b16 %v2045
        %v2181 = vunpack.c.l.b16 %v2046
        %v2182 = vunpack.c.l.b16 %v2047
        %v2183 = vunpack.c.l.b16 %v2048
        %v2184 = vunpack.c.l.b16 %v2049
        %v2185 = vunpack.c.l.b16 %v2050
        %v2186 = vunpack.c.l.b16 %v2051
        %v2187 = vunpack.c.l.b16 %v2052
        %v2188 = vunpack.c.l.b16 %v2053
        %v2189 = vunpack.c.l.b16 %v2054
        %v2190 = vpack.c.b16 %v2127, %v2126
        %v2191 = vpack.c.b16 %v2129, %v2128
        %v2192 = vpack.c.b16 %v2131, %v2130
        %v2193 = vpack.c.b16 %v2133, %v2132
        %v2194 = vpack.c.b16 %v2135, %v2134
        %v2195 = vpack.c.b16 %v2137, %v2136
        %v2196 = vpack.c.b16 %v2139, %v2138
        %v2197 = vpack.c.b16 %v2141, %v2140
        %v2198 = vpack.c.b16 %v2143, %v2142
        %v2199 = vpack.c.b16 %v2145, %v2144
        %v2200 = vpack.c.b16 %v2147, %v2146
        %v2201 = vpack.c.b16 %v2149, %v2148
        %v2202 = vpack.c.b16 %v2151, %v2150
        %v2203 = vpack.c.b16 %v2153, %v2152
        %v2204 = vpack.c.b16 %v2155, %v2154
        %v2205 = vpack.c.b16 %v2157, %v2156
        %v2206 = vpack.c.b16 %v2159, %v2158
        %v2207 = vpack.c.b16 %v2161, %v2160
        %v2208 = vpack.c.b16 %v2163, %v2162
        %v2209 = vpack.c.b16 %v2165, %v2164
        %v2210 = vpack.c.b16 %v2167, %v2166
        %v2211 = vpack.c.b16 %v2169, %v2168
        %v2212 = vpack.c.b16 %v2171, %v2170
        %v2213 = vpack.c.b16 %v2173, %v2172
        %v2214 = vpack.c.b16 %v2175, %v2174
        %v2215 = vpack.c.b16 %v2177, %v2176
        %v2216 = vpack.c.b16 %v2179, %v2178
        %v2217 = vpack.c.b16 %v2181, %v2180
        %v2218 = vpack.c.b16 %v2183, %v2182
        %v2219 = vpack.c.b16 %v2185, %v2184
        %v2220 = vpack.c.b16 %v2187, %v2186
        %v2221 = vpack.c.b16 %v2189, %v2188
        %2254 = vmatprep.subr.bf16.mxu0 0
        %2255 = vmatpush1.bf16.msra.mxu0 %v2190
        %2256 = vmatprep.subr.bf16.mxu0 0
        %2257 = vmatpush1.bf16.msra.mxu0 %v2191
        %2258 = vmatprep.subr.bf16.mxu0 0
        %2259 = vmatpush1.bf16.msra.mxu0 %v2192
        %2260 = vmatprep.subr.bf16.mxu0 0
        %2261 = vmatpush1.bf16.msra.mxu0 %v2193
        %2262 = vmatprep.subr.bf16.mxu0 0
        %2263 = vmatpush1.bf16.msra.mxu0 %v2194
        %2264 = vmatprep.subr.bf16.mxu0 0
        %2265 = vmatpush1.bf16.msra.mxu0 %v2195
        %2266 = vmatprep.subr.bf16.mxu0 0
        %2267 = vmatpush1.bf16.msra.mxu0 %v2196
        %2268 = vmatprep.subr.bf16.mxu0 0
        %2269 = vmatpush1.bf16.msra.mxu0 %v2197
        %2270 = vmatprep.subr.bf16.mxu0 0
        %2271 = vmatpush1.bf16.msra.mxu0 %v2198
        %2272 = vmatprep.subr.bf16.mxu0 0
        %2273 = vmatpush1.bf16.msra.mxu0 %v2199
        %2274 = vmatprep.subr.bf16.mxu0 0
        %2275 = vmatpush1.bf16.msra.mxu0 %v2200
        %2276 = vmatprep.subr.bf16.mxu0 0
        %2277 = vmatpush1.bf16.msra.mxu0 %v2201
        %2278 = vmatprep.subr.bf16.mxu0 0
        %2279 = vmatpush1.bf16.msra.mxu0 %v2202
        %2280 = vmatprep.subr.bf16.mxu0 0
        %2281 = vmatpush1.bf16.msra.mxu0 %v2203
        %2282 = vmatprep.subr.bf16.mxu0 0
        %2283 = vmatpush1.bf16.msra.mxu0 %v2204
        %2284 = vmatprep.subr.bf16.mxu0 0
        %2285 = vmatpush1.bf16.msra.mxu0 %v2205
        %2286 = vmatprep.mubr.bf16.mxu0 %v1988
        %2287 = vmatmul.mubr.bf16.gmra.mrb[0].mxu0 %v1987
        %v2288 = vpop.f32.mrb[0].mxu0
        %v2289 = vadd.f32 %v2060, %v2288
        %v2290 = vpop.f32.mrb[0].mxu0
        %v2291 = vpop.f32.mrb[0].mxu0
        %v2292 = vpop.f32.mrb[0].mxu0
        %2293 = vdwg.mxu0
        %2294 = vmatprep.subr.bf16.mxu0 0
        %2295 = vmatpush1.bf16.msra.mxu0 %v2206
        %2296 = vmatprep.subr.bf16.mxu0 0
        %2297 = vmatpush1.bf16.msra.mxu0 %v2207
        %2298 = vmatprep.subr.bf16.mxu0 0
        %2299 = vmatpush1.bf16.msra.mxu0 %v2208
        %2300 = vmatprep.subr.bf16.mxu0 0
        %2301 = vmatpush1.bf16.msra.mxu0 %v2209
        %2302 = vmatprep.subr.bf16.mxu0 0
        %2303 = vmatpush1.bf16.msra.mxu0 %v2210
        %2304 = vmatprep.subr.bf16.mxu0 0
        %2305 = vmatpush1.bf16.msra.mxu0 %v2211
        %2306 = vmatprep.subr.bf16.mxu0 0
        %2307 = vmatpush1.bf16.msra.mxu0 %v2212
        %2308 = vmatprep.subr.bf16.mxu0 0
        %2309 = vmatpush1.bf16.msra.mxu0 %v2213
        %2310 = vmatprep.subr.bf16.mxu0 0
        %2311 = vmatpush1.bf16.msra.mxu0 %v2214
        %2312 = vmatprep.subr.bf16.mxu0 0
        %2313 = vmatpush1.bf16.msra.mxu0 %v2215
        %2314 = vmatprep.subr.bf16.mxu0 0
        %2315 = vmatpush1.bf16.msra.mxu0 %v2216
        %2316 = vmatprep.subr.bf16.mxu0 0
        %2317 = vmatpush1.bf16.msra.mxu0 %v2217
        %2318 = vmatprep.subr.bf16.mxu0 0
        %2319 = vmatpush1.bf16.msra.mxu0 %v2218
        %2320 = vmatprep.subr.bf16.mxu0 0
        %2321 = vmatpush1.bf16.msra.mxu0 %v2219
        %2322 = vmatprep.subr.bf16.mxu0 0
        %2323 = vmatpush1.bf16.msra.mxu0 %v2220
        %2324 = vmatprep.subr.bf16.mxu0 0
        %2325 = vmatpush1.bf16.msra.mxu0 %v2221
        %2326 = vmatprep.mubr.bf16.mxu0 %v1990
        %2327 = vmatmul.mubr.bf16.gmra.mrb[0].mxu0 %v1989
        %v2328 = vpop.f32.mrb[0].mxu0
        %v2329 = vadd.f32 %v2289, %v2328
        %v2330 = vpop.f32.mrb[0].mxu0
        %v2331 = vpop.f32.mrb[0].mxu0
        %v2332 = vpop.f32.mrb[0].mxu0
        %2333 = vdwg.mxu0
        %2334 = vmax.xlane.f32.xlu0 %v2329
        %v2335 = vpop.xlane.xlu0 %2334
        %v2336 = vsub.f32 %v2329, %v2335
        %v2337 = vmul.f32 %v2336, 1.442695
        %v2338 = vpow.pop %v2337
        %2339 = vadd.xlane.f32.xlu0 %v2338
        %v2340 = vpop.xlane.xlu0 %2339
        %v2341 = vlog2.pop %v2340
        %v2342 = vmul.f32 %v2341, 0.6931472
        %v2343 = vsub.f32 %v2336, %v2342
        %2344 = vst [vmem:[%s405] sm:$0xff] %v2343
        %s2345 = sand.u32 %s230, 1
        %s2346 = scalar_lea.sflag [#allocation4], %s2345
        %s2347 = sand.u32 %s230, 1
        %s2348 = smul.addr %s2347, 8
        %s2349 = scalar_lea.vmem [#allocation11], %s2348
        // Predicated region
        $region77: #{tpu_custom_call.1} parent=55 // pred_check
          %p2350 = pneg %p240
        $region78: #{tpu_custom_call.1} parent=55 // pred_check_branch
          %2352 = sbr.rel (%p2350) target = $region80
        $region79: #{tpu_custom_call.1} parent=55 // pred_region
          %s2354 = ssub.s32 128, 128
          %2355 = vsyncadd %s2346, %s2354
          %s2356 = smul.addr %s28, 128
          %s2357 = scalar_lea.hbm %s9, %s2356
          %s2359 = sshll.u32 %s2349, 4
          %s2360 = int_to_ptr.vmem [resolvable:$true] %s2359
          %2362 = dma.vmem_to_hbm [thread:$0]  %s2360, 128, %s2357, %s2346
        $region80: #{tpu_custom_call.1} parent=55 // pred_fallthru
          _
      $region56: #{tpu_custom_call.1} parent=5 // pred_fallthru
        _
      %p2363 = scmp.le.s32.totalorder 2, %s23
      // Predicated region
      $region81: #{tpu_custom_call.1} parent=5 // pred_check
        %p2364 = pneg %p2363
      $region82: #{tpu_custom_call.1} parent=5 // pred_check_branch
        %2366 = sbr.rel (%p2364) target = $region84
      $region83: #{tpu_custom_call.1} parent=5 // pred_region
        %s2367 = ssub.s32 %s23, 2
        // Predicated region
        $region85: #{tpu_custom_call.1} parent=83 // pred_check
          %p2368 = pneg %p246
        $region86: #{tpu_custom_call.1} parent=83 // pred_check_branch
          %2370 = sbr.rel (%p2368) target = $region88
        $region87: #{tpu_custom_call.1} parent=83 // pred_region
          %s2371 = sand.u32 %s231, 1
          %s2372 = scalar_lea.sflag [#allocation4], %s2371
          %s2373 = sand.u32 %s231, 1
          %s2374 = smul.addr %s2373, 8
          %s2375 = scalar_lea.vmem [#allocation11], %s2374
          %2376 = dma.done %s2372, 128
        $region88: #{tpu_custom_call.1} parent=83 // pred_fallthru
          _
      $region84: #{tpu_custom_call.1} parent=5 // pred_fallthru
        _
    $region6: #{tpu_custom_call.1} parent=1 // loop_footer
      %s27 = sadd.s32 1, %s23
    $region7: #{tpu_custom_call.1} parent=1 // loop_footer_branch
      %22 = sbr.rel target = $region3
    $region8: #{tpu_custom_call.1} parent=1 // loop_exit
      _
    %2377 = vsyncpa [#allocation3], 1
    %s2378 = scalar_lea.sflag [#allocation3], 1
    %2379 = vsyncpa %s2378, 1
    %2380 = vsyncpa [#allocation6], 1
    %2381 = vsyncpa [#allocation9], 1
    %2382 = vsyncpa [#allocation4], 1
    %s2383 = scalar_lea.sflag [#allocation4], 1
    %2384 = vsyncpa %s2383, 1

</llo_original>
